<compile_context>
chip_gen: v7x
topology: tpu7x:2x2x1
jax: 0.10.0
libtpu: 0.0.40
codegen_flags: <defaults>
</compile_context>

<pallas_src>
import functools

import jax
import jax.numpy as jnp
from jax import lax
from jax.experimental import pallas as pl
from jax.experimental.pallas import tpu as pltpu
from jax.scipy.linalg import cho_factor, cho_solve

_LANE = 128
_SUBLANE = 8


def _round_up(v, m):
    return (v + m - 1) // m * m


def _pick_ktile(d_in_pad):
    # d_in_pad is always a multiple of 128; cap the K tile at 512 so double
    # buffers of (n_rows, tk) x-tiles + (tk, feat_pad) weight tiles stay well
    # inside the per-generation VMEM budget (explicit limit set below).
    for cand in (512, 256, 128):
        if d_in_pad % cand == 0:
            return cand
    return d_in_pad


# ---------------------------------------------------------------------------
# Fused Pallas kernel: z = relu(x @ W + b);  gram = sup @ sup.T; compT = q @ sup.T
# ---------------------------------------------------------------------------

def _make_encode_gram_kernel(ns_lane, num_support, num_query):
    def kernel(x_ref, w_ref, b_ref, gram_ref, compT_ref, acc_ref):
        k = pl.program_id(0)

        @pl.when(k == 0)
        def _():
            acc_ref[...] = jnp.zeros_like(acc_ref)

        # Encoder matmul: bf16 MXU operands, f32 accumulation in VMEM scratch.
        acc_ref[...] += jnp.dot(x_ref[...], w_ref[...],
                                preferred_element_type=jnp.float32)

        @pl.when(k == pl.num_programs(0) - 1)
        def _():
            # f32 epilogue (bias + ReLU) — portable to v5e (no bf16 VPU).
            z = jnp.maximum(acc_ref[...] + b_ref[...], 0.0)
            zb = z.astype(jnp.bfloat16)          # cast exactly once

            # Zero padded rows in-kernel: their x rows are zero but the bias
            # makes z = relu(b) != 0 — without this the padding invariant
            # would leak into the padded gram/compat columns.
            n_rows = acc_ref.shape[0]
            r = lax.broadcasted_iota(jnp.int32, (n_rows, 1), 0)
            valid = (r < num_support) | ((r >= ns_lane) &
                                         (r < ns_lane + num_query))
            zb = jnp.where(valid, zb, jnp.zeros_like(zb))

            # Support block is the first ns_lane rows (128-multiple -> aligned
            # bf16 slice, no repack / partial packed store).
            sup = zb[:ns_lane, :]

            # One dot, contracting the last axis of BOTH operands (no explicit
            # transpose op):
            #   rows [:ns_lane]  -> kernel_matrix  = support @ support.T
            #   rows [ns_lane:]  -> compatibility.T = query  @ support.T
            g = lax.dot_general(zb, sup, (((1,), (1,)), ((), ())),
                                preferred_element_type=jnp.float32)
            gram_ref[...] = g[:ns_lane, :]
            compT_ref[...] = g[ns_lane:, :]

    return kernel


def encode_and_gram(x_ord, w_pad, b_pad, *, ns_lane, nq_pad,
                    num_support, num_query):
    n_rows, d_in_pad = x_ord.shape
    feat_pad = w_pad.shape[1]
    tk = _pick_ktile(d_in_pad)
    grid = (d_in_pad // tk,)

    return pl.pallas_call(
        _make_encode_gram_kernel(ns_lane, num_support, num_query),
        out_shape=(
            jax.ShapeDtypeStruct((ns_lane, ns_lane), jnp.float32),   # gram
            jax.ShapeDtypeStruct((nq_pad, ns_lane), jnp.float32),    # compT
        ),
        grid_spec=pltpu.PrefetchScalarGridSpec(
            num_scalar_prefetch=0,
            grid=grid,
            in_specs=[
                pl.BlockSpec((n_rows, tk), lambda k: (0, k)),        # x tile
                pl.BlockSpec((tk, feat_pad), lambda k: (k, 0)),      # W tile
                pl.BlockSpec((1, feat_pad), lambda k: (0, 0)),       # bias
            ],
            out_specs=[
                pl.BlockSpec((ns_lane, ns_lane), lambda k: (0, 0)),
                pl.BlockSpec((nq_pad, ns_lane), lambda k: (0, 0)),
            ],
            scratch_shapes=[
                pltpu.VMEM((n_rows, feat_pad), jnp.float32),         # z acc
            ]),
        compiler_params=pltpu.CompilerParams(
            dimension_semantics=("arbitrary",),          # K is a reduction axis
            vmem_limit_bytes=48 * 1024 * 1024),          # fits v7x (64 MiB/TC)
    )(x_ord, w_pad, b_pad)


# ---------------------------------------------------------------------------
# QP solver (plain-JAX glue; replaces qpth.QPFunction)
# ---------------------------------------------------------------------------

def qp_solve(G, e, h, A, b, max_iter=15):
    """min 0.5 z'Gz + e'z  s.t.  z <= h (C = I),  A z = b."""
    n = G.shape[0]
    sigma = jnp.float32(0.1)

    def max_step(v, dv):
        # Guarded fraction-to-boundary: no division by dv >= 0 entries.
        neg = dv < 0.0
        safe_dv = jnp.where(neg, dv, jnp.float32(-1.0))
        return jnp.min(jnp.where(neg, -v / safe_dv, jnp.inf))

    def body(_, state):
        z, s, lam, nu = state
        s_safe = jnp.maximum(s, jnp.float32(1e-30))

        r_d = G @ z + e + lam + A.T @ nu          # dual residual (C^T lam = lam)
        r_p = z + s - h                           # primal ineq residual
        r_e = A @ z - b                           # primal eq residual
        mu = jnp.dot(s, lam) / n
        r_c = s * lam - sigma * mu                # centered complementarity

        # Eliminate ds, dlam analytically:
        #   (G + diag(lam/s)) dz + A' dnu = rhs1 ;  A dz = -r_e
        w = lam / s_safe
        H = G + jnp.diag(w)                       # SPD: G = blockK + I, w > 0
        rhs1 = -(r_d + (lam * r_p - r_c) / s_safe)

        cH = cho_factor(H)
        HiA = cho_solve(cH, A.T)                  # (n, p)
        Hir = cho_solve(cH, rhs1)                 # (n,)
        S = A @ HiA                               # (p, p) Schur complement
        dnu = jnp.linalg.solve(S, A @ Hir + r_e)  # tiny p x p solve (robust LU)
        dz = Hir - HiA @ dnu
        ds = -r_p - dz
        dlam = (lam * dz + lam * r_p - r_c) / s_safe

        alpha = jnp.minimum(
            jnp.float32(1.0),
            0.99 * jnp.minimum(max_step(s, ds), max_step(lam, dlam)))
        return (z + alpha * dz, s + alpha * ds,
                lam + alpha * dlam, nu + alpha * dnu)

    p = A.shape[0]
    z0 = jnp.zeros((n,), jnp.float32)
    s0 = jnp.ones((n,), jnp.float32)
    l0 = jnp.ones((n,), jnp.float32)
    nu0 = jnp.zeros((p,), jnp.float32)
    z, _, _, _ = lax.fori_loop(0, max_iter, body, (z0, s0, l0, nu0))
    return z


# ---------------------------------------------------------------------------
# MetaOptNet forward
# ---------------------------------------------------------------------------

@functools.partial(jax.jit, static_argnames=("n_way", "n_support", "max_iter"))
def metaoptnet_forward(x, w_enc, b_enc, *, n_way, n_support,
                       C_reg=0.1, max_iter=15):
    nw, nshot = x.shape[0], x.shape[1]
    n_query = nshot - n_support
    N = nw * nshot
    d_in = 1
    for dim in x.shape[2:]:
        d_in *= dim
    feat_dim = w_enc.shape[1]

    num_support = n_way * n_support
    num_query = n_way * n_query

    # Padded, lane/sublane-friendly layout.  The support block is padded to a
    # full lane-dense 128-multiple so it can serve directly as the "N" operand
    # of the gram/compat dot (lane-dense outputs, aligned bf16 slices).
    d_in_pad = _round_up(d_in, _LANE)
    feat_pad = _round_up(feat_dim, _LANE)
    ns_lane = _round_up(num_support, _LANE)
    nq_pad = _round_up(num_query, _SUBLANE)
    n_rows = ns_lane + nq_pad

    # Flatten, reorder rows (supports first, then queries — identical to the
    # PyTorch x[:, :n_support] / x[:, n_support:] split) and build the padded
    # input directly in bf16 (no f32 padded copy + separate cast pass).
    x_flat = x.reshape(N, d_in).astype(jnp.bfloat16)
    idx = jnp.arange(N).reshape(n_way, nshot)
    sup_idx = idx[:, :n_support].reshape(-1)
    qry_idx = idx[:, n_support:].reshape(-1)

    x_ord = jnp.zeros((n_rows, d_in_pad), jnp.bfloat16)
    x_ord = x_ord.at[:num_support, :d_in].set(x_flat[sup_idx])
    x_ord = x_ord.at[ns_lane:ns_lane + num_query, :d_in].set(x_flat[qry_idx])

    w_pad = (jnp.zeros((d_in_pad, feat_pad), jnp.bfloat16)
             .at[:d_in, :feat_dim].set(w_enc.astype(jnp.bfloat16)))
    b_pad = (jnp.zeros((1, feat_pad), jnp.float32)
             .at[:, :feat_dim].set(b_enc.reshape(1, feat_dim).astype(jnp.float32)))

    # --- fused Pallas kernel: encoder + gram + compatibility ----------------
    gram_pad, compT_pad = encode_and_gram(
        x_ord, w_pad, b_pad,
        ns_lane=ns_lane, nq_pad=nq_pad,
        num_support=num_support, num_query=num_query)

    kernel_matrix = gram_pad[:num_support, :num_support]   # support @ support.T
    compT = compT_pad[:num_query, :num_support]            # query @ support.T

    # --- QP data (broadcast build, no jnp.kron / extra eye temporaries) -----
    n = n_way * num_support
    eye_w = jnp.eye(n_way, dtype=jnp.float32)
    blockK = (kernel_matrix[:, None, :, None] * eye_w[None, :, None, :]).reshape(n, n)
    G = blockK + jnp.eye(n, dtype=jnp.float32)

    support_labels = jnp.repeat(jnp.arange(n_way), n_support)
    onehot = jax.nn.one_hot(support_labels, n_way, dtype=jnp.float32).reshape(-1)
    e = -onehot
    h = C_reg * onehot
    A = jnp.repeat(jnp.eye(num_support, dtype=jnp.float32), n_way, axis=1)
    b = jnp.zeros((num_support,), jnp.float32)

    qp_sol = qp_solve(G, e, h, A, b, max_iter).reshape(num_support, n_way)

    # logits[q, c] = sum_s compat[s, q] * qp[s, c] — tiny f32 matmul, left to
    # XLA so it fuses with the QP epilogue (no extra kernel launch).
    logits = compT @ qp_sol
    return logits


# ---------------------------------------------------------------------------
# main
# ---------------------------------------------------------------------------

if __name__ == "__main__":
    n_way, n_support, n_query = 2, 2, 3
    C, H, W = 4, 16, 16
    feat_dim = 32

    key = jax.random.PRNGKey(0)
    kx, kw, kb = jax.random.split(key, 3)

    x = jax.random.normal(kx, (n_way, n_support + n_query, C, H, W),
                          dtype=jnp.float32)
    w_enc = (jax.random.normal(kw, (C * H * W, feat_dim), dtype=jnp.float32)
             / jnp.sqrt(jnp.float32(C * H * W)))
    b_enc = 0.01 * jax.random.normal(kb, (1, feat_dim), dtype=jnp.float32)

    scores = metaoptnet_forward(x, w_enc, b_enc, n_way=n_way, n_support=n_support)
    scores = jax.block_until_ready(scores)

    assert scores.shape == (n_way * n_query, n_way)
    assert bool(jnp.all(jnp.isfinite(scores)))
    print("KERNEL_OK")
</pallas_src>

<mosaic_0001>
module attributes {stable_mosaic.version = 11 : i64} {
  func.func @kernel(%arg0: i32, %arg1: memref<136x512xbf16, #tpu.memory_space<vmem>>, %arg2: memref<512x128xbf16, #tpu.memory_space<vmem>>, %arg3: memref<1x128xf32, #tpu.memory_space<vmem>>, %arg4: memref<128x128xf32, #tpu.memory_space<vmem>>, %arg5: memref<8x128xf32, #tpu.memory_space<vmem>>, %arg6: memref<136x128xf32, #tpu.memory_space<vmem>>) attributes {dimension_semantics = [#tpu.dimension_semantics<arbitrary>], iteration_bounds = array<i64: 2>, scalar_prefetch = 0 : i64, scratch_operands = 1 : i64, tpu.core_type = #tpu.core_type<tc>, window_params = [{transform_indices = @transform_0, window_bounds = array<i64: 136, 512>}, {transform_indices = @transform_1, window_bounds = array<i64: 512, 128>}, {pipeline_mode = #tpu.pipeline_mode<synchronous>, transform_indices = @transform_2, window_bounds = array<i64: 1, 128>}, {pipeline_mode = #tpu.pipeline_mode<synchronous>, transform_indices = @transform_3, window_bounds = array<i64: 128, 128>}, {pipeline_mode = #tpu.pipeline_mode<synchronous>, transform_indices = @transform_4, window_bounds = array<i64: 8, 128>}]} {
    %c0_i32 = arith.constant 0 : i32
    %0 = arith.cmpi eq, %arg0, %c0_i32 : i32
    %1 = arith.extui %0 : i1 to i32
    %c0_i32_0 = arith.constant 0 : i32
    %2 = arith.cmpi ne, %1, %c0_i32_0 : i32
    scf.if %2 {
      %cst_9 = arith.constant 0.000000e+00 : f32
      %12 = vector.broadcast %cst_9 : f32 to vector<136x128xf32>
      %c0_10 = arith.constant 0 : index
      %c0_11 = arith.constant 0 : index
      %13 = vector.load %arg6[%c0_10, %c0_11] : memref<136x128xf32, #tpu.memory_space<vmem>>, vector<136x128xf32>
      tpu.vector_store %arg6[%c0_10, %c0_11], %12 {strides = array<i32>} : memref<136x128xf32, #tpu.memory_space<vmem>>, vector<136x128xf32>,
    } else {
    }
    %c0 = arith.constant 0 : index
    %c0_1 = arith.constant 0 : index
    %3 = vector.load %arg6[%c0, %c0_1] : memref<136x128xf32, #tpu.memory_space<vmem>>, vector<136x128xf32>
    %c0_2 = arith.constant 0 : index
    %c0_3 = arith.constant 0 : index
    %4 = vector.load %arg1[%c0_2, %c0_3] : memref<136x512xbf16, #tpu.memory_space<vmem>>, vector<136x512xbf16>
    %c0_4 = arith.constant 0 : index
    %c0_5 = arith.constant 0 : index
    %5 = vector.load %arg2[%c0_4, %c0_5] : memref<512x128xbf16, #tpu.memory_space<vmem>>, vector<512x128xbf16>
    %cst = arith.constant dense<0.000000e+00> : vector<136x128xf32>
    %6 = tpu.matmul %4, %5, %cst {dimension_numbers = #tpu.dot_dimension_numbers<[1], [0], [0], [1], [0, 0, 1, 1], [], []>} : vector<136x512xbf16>, vector<512x128xbf16>, vector<136x128xf32> -> vector<136x128xf32>
    %7 = arith.addf %3, %6 : vector<136x128xf32>
    %c0_6 = arith.constant 0 : index
    %c0_7 = arith.constant 0 : index
    %8 = vector.load %arg6[%c0_6, %c0_7] : memref<136x128xf32, #tpu.memory_space<vmem>>, vector<136x128xf32>
    tpu.vector_store %arg6[%c0_6, %c0_7], %7 {strides = array<i32>} : memref<136x128xf32, #tpu.memory_space<vmem>>, vector<136x128xf32>,
    %c1_i32 = arith.constant 1 : i32
    %9 = arith.cmpi eq, %arg0, %c1_i32 : i32
    %10 = arith.extui %9 : i1 to i32
    %c0_i32_8 = arith.constant 0 : i32
    %11 = arith.cmpi ne, %10, %c0_i32_8 : i32
    scf.if %11 {
      %c0_9 = arith.constant 0 : index
      %c0_10 = arith.constant 0 : index
      %12 = vector.load %arg6[%c0_9, %c0_10] : memref<136x128xf32, #tpu.memory_space<vmem>>, vector<136x128xf32>
      %c0_11 = arith.constant 0 : index
      %c0_12 = arith.constant 0 : index
      %13 = vector.load %arg3[%c0_11, %c0_12] : memref<1x128xf32, #tpu.memory_space<vmem>>, vector<1x128xf32>
      %14 = vector.broadcast %13 : vector<1x128xf32> to vector<136x128xf32>
      %15 = arith.addf %12, %14 : vector<136x128xf32>
      %cst_13 = arith.constant 0.000000e+00 : f32
      %16 = vector.broadcast %cst_13 : f32 to vector<136x128xf32>
      %17 = arith.maximumf %15, %16 : vector<136x128xf32>
      %18 = arith.truncf %17 : vector<136x128xf32> to vector<136x128xbf16>
      %19 = tpu.iota {dimensions = array<i32: 0>} : vector<136x1xi32>
      %c4_i32 = arith.constant 4 : i32
      %20 = vector.broadcast %c4_i32 : i32 to vector<136x1xi32>
      %21 = arith.cmpi slt, %19, %20 : vector<136x1xi32>
      %c128_i32 = arith.constant 128 : i32
      %22 = vector.broadcast %c128_i32 : i32 to vector<136x1xi32>
      %23 = arith.cmpi sge, %19, %22 : vector<136x1xi32>
      %c134_i32 = arith.constant 134 : i32
      %24 = vector.broadcast %c134_i32 : i32 to vector<136x1xi32>
      %25 = arith.cmpi slt, %19, %24 : vector<136x1xi32>
      %26 = arith.andi %23, %25 : vector<136x1xi1>
      %27 = arith.ori %21, %26 : vector<136x1xi1>
      %cst_14 = arith.constant 0.000000e+00 : bf16
      %28 = vector.broadcast %cst_14 : bf16 to vector<136x128xbf16>
      %29 = vector.shape_cast %27 : vector<136x1xi1> to vector<136x1xi1>
      %30 = vector.broadcast %29 : vector<136x1xi1> to vector<136x128xi1>
      %31 = arith.select %30, %18, %28 : vector<136x128xi1>, vector<136x128xbf16>
      %32 = vector.extract_strided_slice %31 {offsets = [0, 0], sizes = [128, 128], strides = [1, 1]} : vector<136x128xbf16> to vector<128x128xbf16>
      %cst_15 = arith.constant dense<0.000000e+00> : vector<136x128xf32>
      %33 = tpu.matmul %31, %32, %cst_15 {dimension_numbers = #tpu.dot_dimension_numbers<[1], [1], [0], [0], [0, 0, 1, 0], [], []>} : vector<136x128xbf16>, vector<128x128xbf16>, vector<136x128xf32> -> vector<136x128xf32>
      %34 = vector.extract_strided_slice %33 {offsets = [0, 0], sizes = [128, 128], strides = [1, 1]} : vector<136x128xf32> to vector<128x128xf32>
      %c0_16 = arith.constant 0 : index
      %c0_17 = arith.constant 0 : index
      %35 = vector.load %arg4[%c0_16, %c0_17] : memref<128x128xf32, #tpu.memory_space<vmem>>, vector<128x128xf32>
      tpu.vector_store %arg4[%c0_16, %c0_17], %34 {strides = array<i32>} : memref<128x128xf32, #tpu.memory_space<vmem>>, vector<128x128xf32>,
      %36 = vector.extract_strided_slice %33 {offsets = [128, 0], sizes = [8, 128], strides = [1, 1]} : vector<136x128xf32> to vector<8x128xf32>
      %c0_18 = arith.constant 0 : index
      %c0_19 = arith.constant 0 : index
      %37 = vector.load %arg5[%c0_18, %c0_19] : memref<8x128xf32, #tpu.memory_space<vmem>>, vector<8x128xf32>
      tpu.vector_store %arg5[%c0_18, %c0_19], %36 {strides = array<i32>} : memref<8x128xf32, #tpu.memory_space<vmem>>, vector<8x128xf32>,
    } else {
    }
    return
  }
  func.func @transform_0(%arg0: i32) -> (i32, i32) {
    %c0_i32 = arith.constant 0 : i32
    %c0_i32_0 = arith.constant 0 : i32
    return %c0_i32, %arg0 : i32, i32
  }
  func.func @transform_1(%arg0: i32) -> (i32, i32) {
    %c0_i32 = arith.constant 0 : i32
    %c0_i32_0 = arith.constant 0 : i32
    return %arg0, %c0_i32 : i32, i32
  }
  func.func @transform_2(%arg0: i32) -> (i32, i32) {
    %c0_i32 = arith.constant 0 : i32
    %c0_i32_0 = arith.constant 0 : i32
    %c0_i32_1 = arith.constant 0 : i32
    return %c0_i32, %c0_i32_0 : i32, i32
  }
  func.func @transform_3(%arg0: i32) -> (i32, i32) {
    %c0_i32 = arith.constant 0 : i32
    %c0_i32_0 = arith.constant 0 : i32
    %c0_i32_1 = arith.constant 0 : i32
    return %c0_i32, %c0_i32_0 : i32, i32
  }
  func.func @transform_4(%arg0: i32) -> (i32, i32) {
    %c0_i32 = arith.constant 0 : i32
    %c0_i32_0 = arith.constant 0 : i32
    %c0_i32_1 = arith.constant 0 : i32
    return %c0_i32, %c0_i32_0 : i32, i32
  }
}

</mosaic_0001>

<llo_original>
// kernel: eq.3
$region0: #{eq.3}
  %s0 = inlined_call_operand.vmem [shape: s32[2,2], index: 0, kind: input, shape index: {}]
  %s1 = inlined_call_operand.vmem [shape: s32[4], index: 1, kind: output, shape index: {}]
  $region1: #{eq.3} parent=0
    #allocation0 [shape = 'u8[4096]{0}', space=vmem, size = 0x1000, scoped, tag = 'scoped mem for output reshape']
    #allocation1 [shape = 'u8[4096]{0}', space=vmem, size = 0x1000, scoped, tag = 'scoped mem for input reshape']
    %s3 = sshllo.u32 0, 2
    %v4 = vld [vmem:[%s0] sm:%s3]
    %5 = vst [vmem:[#allocation1] sm:%s3] %v4
    %v6 = vld [vmem:[#allocation1] sm:$0x1]
    %vm7 = vcmask 15360
    %8 = vst.msk [vmem:[#allocation0] sm:$0x1] %vm7, %v6
    %s9 = scalar_lea.vmem [#allocation1], 1
    %v10 = vld [vmem:[%s9] sm:$0x1]
    %11 = vrot.lane.b32.xlu0 %v10, 2
    %v12 = vpop.permute.xlu0 %11
    %vm13 = vcmask 31760
    %14 = vst.msk [vmem:[#allocation0] sm:$0x1] %vm13, %v12
    %s16 = sshllo.u32 0, 1
    %v18 = vld [vmem:[#allocation0] sm:%s16]
    %s19 = sshllo.u32 0, 1
    %20 = vst [vmem:[%s1] sm:%s19] %v18

// kernel: custom-call.49
$region0: #{custom-call.49}
  %s0 = inlined_call_operand.vmem [shape: f32[8], index: 0, kind: output, shape index: {}]

// kernel: custom-call.52
$region0: #{custom-call.52}
  %s0 = inlined_call_operand.vmem [shape: f32[4], index: 0, kind: output, shape index: {}]

// kernel: custom-call.85
$region0: #{custom-call.85}
  %s0 = inlined_call_operand.vmem [shape: f32[8,8], index: 0, kind: input, shape index: {}]
  %s1 = inlined_call_operand.vmem [shape: f32[8,8], index: 1, kind: output, shape index: {}]
  $region1: #{custom-call.85} parent=0
    #allocation0 [shape = 'u8[4096]{0}', space=vmem, size = 0x1000, scoped, tag = 'operand span for operand 0']
    #allocation1 [shape = 'u8[4096]{0}', space=vmem, size = 0x1000, scoped, tag = 'operand span for operand 1']
    // Predicated region
    $region2: #{custom-call.85} parent=1 // pred_check
      _
    $region3: #{custom-call.85} parent=1 // pred_check_branch
      %3 = sbr.rel (0) target = $region5
    $region4: #{custom-call.85} parent=1 // pred_region
      // Predicated region
      $region6: #{custom-call.85} parent=4 // pred_check
        _
      $region7: #{custom-call.85} parent=4 // pred_check_branch
        %5 = sbr.rel (0) target = $region9
      $region8: #{custom-call.85} parent=4 // pred_region
        // Predicated region
        $region21: #{custom-call.85} parent=8 // pred_check
          _
        $region22: #{custom-call.85} parent=8 // pred_check_branch
          %20 = sbr.rel (0) target = $region24
        $region23: #{custom-call.85} parent=8 // pred_region
          loop: start=0, step=1, limit=1
          $region25: #{custom-call.85} parent=23 // loop_pre_header
            _
          $region26: #{custom-call.85} parent=23 // loop_header
            %s22 = sphi 0, %s26
            %p23 = scmp.ge.s32.totalorder %s22, 1
            %s27 = sphi %s0, %s0
            %s28 = sphi [#allocation0], [#allocation0]
          $region27: #{custom-call.85} parent=23 // loop_header_branch
            %25 = sbr.rel (%p23) target = $region31
          $region28: #{custom-call.85} parent=23 // loop_body
            %v29 = vld [vmem:[%s27] sm:$0xff]
            %30 = vst [vmem:[%s28] sm:$0xff] %v29
          $region29: #{custom-call.85} parent=23 // loop_footer
            %s26 = sadd.s32 1, %s22
          $region30: #{custom-call.85} parent=23 // loop_footer_branch
            %21 = sbr.rel target = $region26
          $region31: #{custom-call.85} parent=23 // loop_exit
            _
        $region24: #{custom-call.85} parent=8 // pred_fallthru
          _
        // Predicated region
        $region32: #{custom-call.85} parent=8 // pred_check
          _
        $region33: #{custom-call.85} parent=8 // pred_check_branch
          %32 = sbr.rel target = $region35
        $region34: #{custom-call.85} parent=8 // pred_region
          _
        $region35: #{custom-call.85} parent=8 // pred_fallthru
          _
      $region9: #{custom-call.85} parent=4 // pred_fallthru
        _
      // Predicated region
      $region10: #{custom-call.85} parent=4 // pred_check
        _
      $region11: #{custom-call.85} parent=4 // pred_check_branch
        %7 = sbr.rel target = $region13
      $region12: #{custom-call.85} parent=4 // pred_region
        loop: start=0, step=1, limit=1
        $region14: #{custom-call.85} parent=12 // loop_pre_header
          _
        $region15: #{custom-call.85} parent=12 // loop_header
          %s10 = sphi 0, %s14
          %p11 = scmp.ge.s32.totalorder %s10, 1
          %s15 = sphi %s0, %s0
          %s16 = sphi [#allocation0], [#allocation0]
        $region16: #{custom-call.85} parent=12 // loop_header_branch
          %13 = sbr.rel (%p11) target = $region20
        $region17: #{custom-call.85} parent=12 // loop_body
          %v17 = vld [vmem:[%s15] sm:$0xff]
          %18 = vst [vmem:[%s16] sm:$0xff] %v17
        $region18: #{custom-call.85} parent=12 // loop_footer
          %s14 = sadd.s32 1, %s10
        $region19: #{custom-call.85} parent=12 // loop_footer_branch
          %9 = sbr.rel target = $region15
        $region20: #{custom-call.85} parent=12 // loop_exit
          _
      $region13: #{custom-call.85} parent=4 // pred_fallthru
        _
    $region5: #{custom-call.85} parent=1 // pred_fallthru
      _
    %33 = vnop
    %34 = vst [vmem:[#allocation1] sm:$0xff] 0.0
    %vm35 = vcmask 7168
    %v36 = vld [vmem:[#allocation1] ss:$0 sm:$0xff]
    %v37 = vld [vmem:[#allocation0] ss:$0 sm:$0xff]
    %v38 = vmul.f32 %v36, %v36
    %39 = vadd.xlane.f32.xlu0 %v38
    %v40 = vpop.xlane.xlu0 %39
    %v41 = vsub.f32 %v37, %v40
    %v42 = vrsqrt.pop %v41
    %v43 = vld [vmem:[#allocation0] sm:$0xff]
    %v44 = vld [vmem:[#allocation1] sm:$0xff]
    %v45 = vmul.f32 %v44, %v36
    %46 = vadd.xlane.f32.xlu0 %v45
    %v47 = vpop.xlane.xlu0 %46
    %v48 = vsub.f32 %v43, %v47
    %v49 = vmul.f32 %v48, %v42
    %v50 = vsel %vm35, %v49, 0.0
    %v51 = vadd.f32 %v44, %v50
    %52 = vst [vmem:[#allocation1] sm:$0xff] %v51
    %vm53 = vcmask 15368
    %s54 = scalar_lea.vmem [#allocation1], 1
    %v55 = vld [vmem:[%s54] ss:$0 sm:$0xff]
    %s56 = scalar_lea.vmem [#allocation0], 1
    %v57 = vld [vmem:[%s56] ss:$0 sm:$0xff]
    %v58 = vmul.f32 %v55, %v55
    %59 = vadd.xlane.f32.xlu0 %v58
    %v60 = vpop.xlane.xlu0 %59
    %v61 = vsub.f32 %v57, %v60
    %v62 = vrsqrt.pop %v61
    %v63 = vld [vmem:[#allocation0] sm:$0xff]
    %v64 = vld [vmem:[#allocation1] sm:$0xff]
    %v65 = vmul.f32 %v64, %v55
    %66 = vadd.xlane.f32.xlu0 %v65
    %v67 = vpop.xlane.xlu0 %66
    %v68 = vsub.f32 %v63, %v67
    %v69 = vmul.f32 %v68, %v62
    %vm70 = vcmask 1047553
    %vm71 = vmand %vm53, %vm70
    %v72 = vsel %vm71, %v69, 0.0
    %v73 = vadd.f32 %v64, %v72
    %74 = vst [vmem:[#allocation1] sm:$0xff] %v73
    %vm75 = vcmask 23568
    %s76 = scalar_lea.vmem [#allocation1], 2
    %v77 = vld [vmem:[%s76] ss:$0 sm:$0xff]
    %s78 = scalar_lea.vmem [#allocation0], 2
    %v79 = vld [vmem:[%s78] ss:$0 sm:$0xff]
    %v80 = vmul.f32 %v77, %v77
    %81 = vadd.xlane.f32.xlu0 %v80
    %v82 = vpop.xlane.xlu0 %81
    %v83 = vsub.f32 %v79, %v82
    %v84 = vrsqrt.pop %v83
    %v85 = vld [vmem:[#allocation0] sm:$0xff]
    %v86 = vld [vmem:[#allocation1] sm:$0xff]
    %v87 = vmul.f32 %v86, %v77
    %88 = vadd.xlane.f32.xlu0 %v87
    %v89 = vpop.xlane.xlu0 %88
    %v90 = vsub.f32 %v85, %v89
    %v91 = vmul.f32 %v90, %v84
    %vm92 = vcmask 1047554
    %vm93 = vmand %vm75, %vm92
    %v94 = vsel %vm93, %v91, 0.0
    %v95 = vadd.f32 %v86, %v94
    %96 = vst [vmem:[#allocation1] sm:$0xff] %v95
    %vm97 = vcmask 31768
    %s98 = scalar_lea.vmem [#allocation1], 3
    %v99 = vld [vmem:[%s98] ss:$0 sm:$0xff]
    %s100 = scalar_lea.vmem [#allocation0], 3
    %v101 = vld [vmem:[%s100] ss:$0 sm:$0xff]
    %v102 = vmul.f32 %v99, %v99
    %103 = vadd.xlane.f32.xlu0 %v102
    %v104 = vpop.xlane.xlu0 %103
    %v105 = vsub.f32 %v101, %v104
    %v106 = vrsqrt.pop %v105
    %v107 = vld [vmem:[#allocation0] sm:$0xff]
    %v108 = vld [vmem:[#allocation1] sm:$0xff]
    %v109 = vmul.f32 %v108, %v99
    %110 = vadd.xlane.f32.xlu0 %v109
    %v111 = vpop.xlane.xlu0 %110
    %v112 = vsub.f32 %v107, %v111
    %v113 = vmul.f32 %v112, %v106
    %vm114 = vcmask 1047555
    %vm115 = vmand %vm97, %vm114
    %v116 = vsel %vm115, %v113, 0.0
    %v117 = vadd.f32 %v108, %v116
    %118 = vst [vmem:[#allocation1] sm:$0xff] %v117
    %vm119 = vcmask 39968
    %s120 = scalar_lea.vmem [#allocation1], 4
    %v121 = vld [vmem:[%s120] ss:$0 sm:$0xff]
    %s122 = scalar_lea.vmem [#allocation0], 4
    %v123 = vld [vmem:[%s122] ss:$0 sm:$0xff]
    %v124 = vmul.f32 %v121, %v121
    %125 = vadd.xlane.f32.xlu0 %v124
    %v126 = vpop.xlane.xlu0 %125
    %v127 = vsub.f32 %v123, %v126
    %v128 = vrsqrt.pop %v127
    %v129 = vld [vmem:[#allocation0] sm:$0xff]
    %v130 = vld [vmem:[#allocation1] sm:$0xff]
    %v131 = vmul.f32 %v130, %v121
    %132 = vadd.xlane.f32.xlu0 %v131
    %v133 = vpop.xlane.xlu0 %132
    %v134 = vsub.f32 %v129, %v133
    %v135 = vmul.f32 %v134, %v128
    %vm136 = vcmask 1047556
    %vm137 = vmand %vm119, %vm136
    %v138 = vsel %vm137, %v135, 0.0
    %v139 = vadd.f32 %v130, %v138
    %140 = vst [vmem:[#allocation1] sm:$0xff] %v139
    %vm141 = vcmask 48168
    %s142 = scalar_lea.vmem [#allocation1], 5
    %v143 = vld [vmem:[%s142] ss:$0 sm:$0xff]
    %s144 = scalar_lea.vmem [#allocation0], 5
    %v145 = vld [vmem:[%s144] ss:$0 sm:$0xff]
    %v146 = vmul.f32 %v143, %v143
    %147 = vadd.xlane.f32.xlu0 %v146
    %v148 = vpop.xlane.xlu0 %147
    %v149 = vsub.f32 %v145, %v148
    %v150 = vrsqrt.pop %v149
    %v151 = vld [vmem:[#allocation0] sm:$0xff]
    %v152 = vld [vmem:[#allocation1] sm:$0xff]
    %v153 = vmul.f32 %v152, %v143
    %154 = vadd.xlane.f32.xlu0 %v153
    %v155 = vpop.xlane.xlu0 %154
    %v156 = vsub.f32 %v151, %v155
    %v157 = vmul.f32 %v156, %v150
    %vm158 = vcmask 1047557
    %vm159 = vmand %vm141, %vm158
    %v160 = vsel %vm159, %v157, 0.0
    %v161 = vadd.f32 %v152, %v160
    %162 = vst [vmem:[#allocation1] sm:$0xff] %v161
    %vm163 = vcmask 56368
    %s164 = scalar_lea.vmem [#allocation1], 6
    %v165 = vld [vmem:[%s164] ss:$0 sm:$0xff]
    %s166 = scalar_lea.vmem [#allocation0], 6
    %v167 = vld [vmem:[%s166] ss:$0 sm:$0xff]
    %v168 = vmul.f32 %v165, %v165
    %169 = vadd.xlane.f32.xlu0 %v168
    %v170 = vpop.xlane.xlu0 %169
    %v171 = vsub.f32 %v167, %v170
    %v172 = vrsqrt.pop %v171
    %v173 = vld [vmem:[#allocation0] sm:$0xff]
    %v174 = vld [vmem:[#allocation1] sm:$0xff]
    %v175 = vmul.f32 %v174, %v165
    %176 = vadd.xlane.f32.xlu0 %v175
    %v177 = vpop.xlane.xlu0 %176
    %v178 = vsub.f32 %v173, %v177
    %v179 = vmul.f32 %v178, %v172
    %vm180 = vcmask 1047558
    %vm181 = vmand %vm163, %vm180
    %v182 = vsel %vm181, %v179, 0.0
    %v183 = vadd.f32 %v174, %v182
    %184 = vst [vmem:[#allocation1] sm:$0xff] %v183
    %vm185 = vcmask 64568
    %s186 = scalar_lea.vmem [#allocation1], 7
    %v187 = vld [vmem:[%s186] ss:$0 sm:$0xff]
    %s188 = scalar_lea.vmem [#allocation0], 7
    %v189 = vld [vmem:[%s188] ss:$0 sm:$0xff]
    %v190 = vmul.f32 %v187, %v187
    %191 = vadd.xlane.f32.xlu0 %v190
    %v192 = vpop.xlane.xlu0 %191
    %v193 = vsub.f32 %v189, %v192
    %v194 = vrsqrt.pop %v193
    %v195 = vld [vmem:[#allocation0] sm:$0xff]
    %v196 = vld [vmem:[#allocation1] sm:$0xff]
    %v197 = vmul.f32 %v196, %v187
    %198 = vadd.xlane.f32.xlu0 %v197
    %v199 = vpop.xlane.xlu0 %198
    %v200 = vsub.f32 %v195, %v199
    %v201 = vmul.f32 %v200, %v194
    %vm202 = vcmask 1047559
    %vm203 = vmand %vm185, %vm202
    %v204 = vsel %vm203, %v201, 0.0
    %v205 = vadd.f32 %v196, %v204
    %206 = vst [vmem:[#allocation1] sm:$0xff] %v205
    // Predicated region
    $region36: #{custom-call.85} parent=1 // pred_check
      _
    $region37: #{custom-call.85} parent=1 // pred_check_branch
      %208 = sbr.rel (0) target = $region39
    $region38: #{custom-call.85} parent=1 // pred_region
      // Predicated region
      $region40: #{custom-call.85} parent=38 // pred_check
        _
      $region41: #{custom-call.85} parent=38 // pred_check_branch
        %210 = sbr.rel (0) target = $region43
      $region42: #{custom-call.85} parent=38 // pred_region
        // Predicated region
        $region55: #{custom-call.85} parent=42 // pred_check
          _
        $region56: #{custom-call.85} parent=42 // pred_check_branch
          %225 = sbr.rel (0) target = $region58
        $region57: #{custom-call.85} parent=42 // pred_region
          loop: start=0, step=1, limit=1
          $region59: #{custom-call.85} parent=57 // loop_pre_header
            _
          $region60: #{custom-call.85} parent=57 // loop_header
            %s227 = sphi 0, %s231
            %p228 = scmp.ge.s32.totalorder %s227, 1
            %s232 = sphi [#allocation1], [#allocation1]
            %s233 = sphi %s1, %s1
          $region61: #{custom-call.85} parent=57 // loop_header_branch
            %230 = sbr.rel (%p228) target = $region65
          $region62: #{custom-call.85} parent=57 // loop_body
            %v234 = vld [vmem:[%s232] sm:$0xff]
            %235 = vst [vmem:[%s233] sm:$0xff] %v234
          $region63: #{custom-call.85} parent=57 // loop_footer
            %s231 = sadd.s32 1, %s227
          $region64: #{custom-call.85} parent=57 // loop_footer_branch
            %226 = sbr.rel target = $region60
          $region65: #{custom-call.85} parent=57 // loop_exit
            _
        $region58: #{custom-call.85} parent=42 // pred_fallthru
          _
        // Predicated region
        $region66: #{custom-call.85} parent=42 // pred_check
          _
        $region67: #{custom-call.85} parent=42 // pred_check_branch
          %237 = sbr.rel target = $region69
        $region68: #{custom-call.85} parent=42 // pred_region
          _
        $region69: #{custom-call.85} parent=42 // pred_fallthru
          _
      $region43: #{custom-call.85} parent=38 // pred_fallthru
        _
      // Predicated region
      $region44: #{custom-call.85} parent=38 // pred_check
        _
      $region45: #{custom-call.85} parent=38 // pred_check_branch
        %212 = sbr.rel target = $region47
      $region46: #{custom-call.85} parent=38 // pred_region
        loop: start=0, step=1, limit=1
        $region48: #{custom-call.85} parent=46 // loop_pre_header
          _
        $region49: #{custom-call.85} parent=46 // loop_header
          %s215 = sphi 0, %s219
          %p216 = scmp.ge.s32.totalorder %s215, 1
          %s220 = sphi [#allocation1], [#allocation1]
          %s221 = sphi %s1, %s1
        $region50: #{custom-call.85} parent=46 // loop_header_branch
          %218 = sbr.rel (%p216) target = $region54
        $region51: #{custom-call.85} parent=46 // loop_body
          %v222 = vld [vmem:[%s220] sm:$0xff]
          %223 = vst [vmem:[%s221] sm:$0xff] %v222
        $region52: #{custom-call.85} parent=46 // loop_footer
          %s219 = sadd.s32 1, %s215
        $region53: #{custom-call.85} parent=46 // loop_footer_branch
          %214 = sbr.rel target = $region49
        $region54: #{custom-call.85} parent=46 // loop_exit
          _
      $region47: #{custom-call.85} parent=38 // pred_fallthru
        _
    $region39: #{custom-call.85} parent=1 // pred_fallthru
      _
    %238 = vnop

// kernel: custom-call.86
$region0: #{custom-call.86}
  %s0 = inlined_call_operand.vmem [shape: f32[1,8,8], index: 0, kind: input, shape index: {}]
  %s1 = inlined_call_operand.vmem [shape: f32[1,8,8], index: 1, kind: output, shape index: {}]
  $region1: #{custom-call.86} parent=0
    #allocation0 [shape = 'u8[4096]{0}', space=vmem, size = 0x1000, scoped, tag = 'operand span for operand 0']
    #allocation1 [shape = 'u8[4096]{0}', space=vmem, size = 0x1000, scoped, tag = 'operand span for operand 1']
    #allocation2 [shape = 'f32[8,8]{1,0}', space=vmem, size = 0x1000, scoped, tag = 'rescaled input a']
    // Predicated region
    $region2: #{custom-call.86} parent=1 // pred_check
      _
    $region3: #{custom-call.86} parent=1 // pred_check_branch
      %3 = sbr.rel (0) target = $region5
    $region4: #{custom-call.86} parent=1 // pred_region
      // Predicated region
      $region6: #{custom-call.86} parent=4 // pred_check
        _
      $region7: #{custom-call.86} parent=4 // pred_check_branch
        %5 = sbr.rel (0) target = $region9
      $region8: #{custom-call.86} parent=4 // pred_region
        // Predicated region
        $region21: #{custom-call.86} parent=8 // pred_check
          _
        $region22: #{custom-call.86} parent=8 // pred_check_branch
          %20 = sbr.rel (0) target = $region24
        $region23: #{custom-call.86} parent=8 // pred_region
          loop: start=0, step=1, limit=1
          $region25: #{custom-call.86} parent=23 // loop_pre_header
            _
          $region26: #{custom-call.86} parent=23 // loop_header
            %s22 = sphi 0, %s26
            %p23 = scmp.ge.s32.totalorder %s22, 1
            %s27 = sphi %s0, %s0
            %s28 = sphi [#allocation0], [#allocation0]
          $region27: #{custom-call.86} parent=23 // loop_header_branch
            %25 = sbr.rel (%p23) target = $region31
          $region28: #{custom-call.86} parent=23 // loop_body
            %v29 = vld [vmem:[%s27] sm:$0xff]
            %30 = vst [vmem:[%s28] sm:$0xff] %v29
          $region29: #{custom-call.86} parent=23 // loop_footer
            %s26 = sadd.s32 1, %s22
          $region30: #{custom-call.86} parent=23 // loop_footer_branch
            %21 = sbr.rel target = $region26
          $region31: #{custom-call.86} parent=23 // loop_exit
            _
        $region24: #{custom-call.86} parent=8 // pred_fallthru
          _
        // Predicated region
        $region32: #{custom-call.86} parent=8 // pred_check
          _
        $region33: #{custom-call.86} parent=8 // pred_check_branch
          %32 = sbr.rel target = $region35
        $region34: #{custom-call.86} parent=8 // pred_region
          _
        $region35: #{custom-call.86} parent=8 // pred_fallthru
          _
      $region9: #{custom-call.86} parent=4 // pred_fallthru
        _
      // Predicated region
      $region10: #{custom-call.86} parent=4 // pred_check
        _
      $region11: #{custom-call.86} parent=4 // pred_check_branch
        %7 = sbr.rel target = $region13
      $region12: #{custom-call.86} parent=4 // pred_region
        loop: start=0, step=1, limit=1
        $region14: #{custom-call.86} parent=12 // loop_pre_header
          _
        $region15: #{custom-call.86} parent=12 // loop_header
          %s10 = sphi 0, %s14
          %p11 = scmp.ge.s32.totalorder %s10, 1
          %s15 = sphi %s0, %s0
          %s16 = sphi [#allocation0], [#allocation0]
        $region16: #{custom-call.86} parent=12 // loop_header_branch
          %13 = sbr.rel (%p11) target = $region20
        $region17: #{custom-call.86} parent=12 // loop_body
          %v17 = vld [vmem:[%s15] sm:$0xff]
          %18 = vst [vmem:[%s16] sm:$0xff] %v17
        $region18: #{custom-call.86} parent=12 // loop_footer
          %s14 = sadd.s32 1, %s10
        $region19: #{custom-call.86} parent=12 // loop_footer_branch
          %9 = sbr.rel target = $region15
        $region20: #{custom-call.86} parent=12 // loop_exit
          _
      $region13: #{custom-call.86} parent=4 // pred_fallthru
        _
    $region5: #{custom-call.86} parent=1 // pred_fallthru
      _
    %33 = vnop
    %v34 = vlaneseq
    %v35 = vand.u32 %v34, 127
    %vm36 = vcmp.lt.s32.totalorder %v35, 8
    %v37 = vlaneseq
    %v38 = vshrl.u32 %v37, 7
    %vm40 = vcmp.eq.s32.totalorder %v38, %v35
    %v41 = vld [vmem:[#allocation0] sm:$0xff]
    %v42 = vsel %vm40, %v41, 0.0
    %43 = vadd.xlane.f32.xlu0 %v42
    %v44 = vpop.xlane.xlu0 %43
    %vm45 = vcmp.le.s32.totalorder %v38, %v35
    %vm46 = vmand %vm45, %vm36
    %v47 = vsel %vm46, %v41, 0.0
    %v48 = vrcp.pop %v44
    %v49 = vmul.f32 %v47, %v48
    %50 = vst [vmem:[#allocation2] sm:$0xff] %v49
    %v51 = vlaneseq
    %v52 = vand.u32 %v51, 127
    %v53 = vlaneseq
    %v54 = vshrl.u32 %v53, 7
    %vm56 = vcmp.eq.s32.totalorder %v52, %v54
    %v57 = vlaneseq
    %v58 = vand.u32 %v57, 127
    %vm59 = vcmp.eq.s32.totalorder %v58, 7
    %v60 = vsel %vm59, 1.0, -1.0
    %v61 = vsel %vm56, %v60, 0.0
    %s62 = scalar_lea.vmem [#allocation2], 6
    %v63 = vld [vmem:[%s62] ss:$0 sm:$0xff]
    %v64 = vxor.u32 %v63, 2147483648
    %v65 = vlaneseq
    %v66 = vand.u32 %v65, 127
    %vm67 = vcmp.eq.s32.totalorder %v66, 6
    %v68 = vmul.f32 %v64, %v61
    %69 = vadd.xlane.f32.xlu0 %v68
    %v70 = vpop.xlane.xlu0 %69
    %v71 = vsel %vm67, %v70, %v61
    %s72 = scalar_lea.vmem [#allocation2], 5
    %v73 = vld [vmem:[%s72] ss:$0 sm:$0xff]
    %v74 = vxor.u32 %v73, 2147483648
    %v75 = vlaneseq
    %v76 = vand.u32 %v75, 127
    %vm77 = vcmp.eq.s32.totalorder %v76, 5
    %v78 = vmul.f32 %v74, %v71
    %79 = vadd.xlane.f32.xlu0 %v78
    %v80 = vpop.xlane.xlu0 %79
    %v81 = vsel %vm77, %v80, %v71
    %s82 = scalar_lea.vmem [#allocation2], 4
    %v83 = vld [vmem:[%s82] ss:$0 sm:$0xff]
    %v84 = vxor.u32 %v83, 2147483648
    %v85 = vlaneseq
    %v86 = vand.u32 %v85, 127
    %vm87 = vcmp.eq.s32.totalorder %v86, 4
    %v88 = vmul.f32 %v84, %v81
    %89 = vadd.xlane.f32.xlu0 %v88
    %v90 = vpop.xlane.xlu0 %89
    %v91 = vsel %vm87, %v90, %v81
    %s92 = scalar_lea.vmem [#allocation2], 3
    %v93 = vld [vmem:[%s92] ss:$0 sm:$0xff]
    %v94 = vxor.u32 %v93, 2147483648
    %v95 = vlaneseq
    %v96 = vand.u32 %v95, 127
    %vm97 = vcmp.eq.s32.totalorder %v96, 3
    %v98 = vmul.f32 %v94, %v91
    %99 = vadd.xlane.f32.xlu0 %v98
    %v100 = vpop.xlane.xlu0 %99
    %v101 = vsel %vm97, %v100, %v91
    %s102 = scalar_lea.vmem [#allocation2], 2
    %v103 = vld [vmem:[%s102] ss:$0 sm:$0xff]
    %v104 = vxor.u32 %v103, 2147483648
    %v105 = vlaneseq
    %v106 = vand.u32 %v105, 127
    %vm107 = vcmp.eq.s32.totalorder %v106, 2
    %v108 = vmul.f32 %v104, %v101
    %109 = vadd.xlane.f32.xlu0 %v108
    %v110 = vpop.xlane.xlu0 %109
    %v111 = vsel %vm107, %v110, %v101
    %s112 = scalar_lea.vmem [#allocation2], 1
    %v113 = vld [vmem:[%s112] ss:$0 sm:$0xff]
    %v114 = vxor.u32 %v113, 2147483648
    %v115 = vlaneseq
    %v116 = vand.u32 %v115, 127
    %vm117 = vcmp.eq.s32.totalorder %v116, 1
    %v118 = vmul.f32 %v114, %v111
    %119 = vadd.xlane.f32.xlu0 %v118
    %v120 = vpop.xlane.xlu0 %119
    %v121 = vsel %vm117, %v120, %v111
    %v122 = vld [vmem:[#allocation2] ss:$0 sm:$0xff]
    %v123 = vxor.u32 %v122, 2147483648
    %v124 = vlaneseq
    %v125 = vand.u32 %v124, 127
    %vm126 = vcmp.eq.s32.totalorder %v125, 0
    %v127 = vmul.f32 %v123, %v121
    %128 = vadd.xlane.f32.xlu0 %v127
    %v129 = vpop.xlane.xlu0 %128
    %v130 = vsel %vm126, %v129, %v121
    %v131 = vrcp.pop %v44
    %v132 = vmul.f32 %v130, %v131
    %vm133 = vweird.f32 %v44
    %v134 = vsel %vm133, %v130, %v132
    %135 = vst [vmem:[#allocation1] sm:$0xff] %v134
    // Predicated region
    $region36: #{custom-call.86} parent=1 // pred_check
      _
    $region37: #{custom-call.86} parent=1 // pred_check_branch
      %137 = sbr.rel (0) target = $region39
    $region38: #{custom-call.86} parent=1 // pred_region
      // Predicated region
      $region40: #{custom-call.86} parent=38 // pred_check
        _
      $region41: #{custom-call.86} parent=38 // pred_check_branch
        %139 = sbr.rel (0) target = $region43
      $region42: #{custom-call.86} parent=38 // pred_region
        // Predicated region
        $region55: #{custom-call.86} parent=42 // pred_check
          _
        $region56: #{custom-call.86} parent=42 // pred_check_branch
          %154 = sbr.rel (0) target = $region58
        $region57: #{custom-call.86} parent=42 // pred_region
          loop: start=0, step=1, limit=1
          $region59: #{custom-call.86} parent=57 // loop_pre_header
            _
          $region60: #{custom-call.86} parent=57 // loop_header
            %s156 = sphi 0, %s160
            %p157 = scmp.ge.s32.totalorder %s156, 1
            %s161 = sphi [#allocation1], [#allocation1]
            %s162 = sphi %s1, %s1
          $region61: #{custom-call.86} parent=57 // loop_header_branch
            %159 = sbr.rel (%p157) target = $region65
          $region62: #{custom-call.86} parent=57 // loop_body
            %v163 = vld [vmem:[%s161] sm:$0xff]
            %164 = vst [vmem:[%s162] sm:$0xff] %v163
          $region63: #{custom-call.86} parent=57 // loop_footer
            %s160 = sadd.s32 1, %s156
          $region64: #{custom-call.86} parent=57 // loop_footer_branch
            %155 = sbr.rel target = $region60
          $region65: #{custom-call.86} parent=57 // loop_exit
            _
        $region58: #{custom-call.86} parent=42 // pred_fallthru
          _
        // Predicated region
        $region66: #{custom-call.86} parent=42 // pred_check
          _
        $region67: #{custom-call.86} parent=42 // pred_check_branch
          %166 = sbr.rel target = $region69
        $region68: #{custom-call.86} parent=42 // pred_region
          _
        $region69: #{custom-call.86} parent=42 // pred_fallthru
          _
      $region43: #{custom-call.86} parent=38 // pred_fallthru
        _
      // Predicated region
      $region44: #{custom-call.86} parent=38 // pred_check
        _
      $region45: #{custom-call.86} parent=38 // pred_check_branch
        %141 = sbr.rel target = $region47
      $region46: #{custom-call.86} parent=38 // pred_region
        loop: start=0, step=1, limit=1
        $region48: #{custom-call.86} parent=46 // loop_pre_header
          _
        $region49: #{custom-call.86} parent=46 // loop_header
          %s144 = sphi 0, %s148
          %p145 = scmp.ge.s32.totalorder %s144, 1
          %s149 = sphi [#allocation1], [#allocation1]
          %s150 = sphi %s1, %s1
        $region50: #{custom-call.86} parent=46 // loop_header_branch
          %147 = sbr.rel (%p145) target = $region54
        $region51: #{custom-call.86} parent=46 // loop_body
          %v151 = vld [vmem:[%s149] sm:$0xff]
          %152 = vst [vmem:[%s150] sm:$0xff] %v151
        $region52: #{custom-call.86} parent=46 // loop_footer
          %s148 = sadd.s32 1, %s144
        $region53: #{custom-call.86} parent=46 // loop_footer_branch
          %143 = sbr.rel target = $region49
        $region54: #{custom-call.86} parent=46 // loop_exit
          _
      $region47: #{custom-call.86} parent=38 // pred_fallthru
        _
    $region39: #{custom-call.86} parent=1 // pred_fallthru
      _
    %167 = vnop

// kernel: custom-call.87
$region0: #{custom-call.87}
  %s0 = inlined_call_operand.vmem [shape: f32[4,4], index: 0, kind: input, shape index: {}]
  %s1 = inlined_call_operand.vmem [shape: f32[4,4], index: 1, kind: output, shape index: {0}]
  %s2 = inlined_call_operand.hbm [shape: s32[4], index: 2, kind: output, shape index: {1}]
  %s3 = inlined_call_operand.vmem [shape: s32[4], index: 3, kind: output, shape index: {2}]
  %4 = xla_tuple %s1, %s2, %s3
  $region1: #{custom-call.87} parent=0
    #allocation0 [shape = 'u8[4096]{0}', space=vmem, size = 0x1000, scoped, tag = 'operand span for operand 0']
    #allocation1 [shape = 'u8[2048]{0}', space=vmem, size = 0x800, scoped, tag = 'packed  for operand 0']
    #allocation2 [shape = 'u8[4096]{0}', space=vmem, size = 0x1000, scoped, tag = 'operand span for operand 1']
    #allocation3 [shape = 'u8[2048]{0}', space=vmem, size = 0x800, scoped, tag = 'packed  for operand 1']
    #allocation4 [shape = 'u8[4096]{0}', space=vmem, size = 0x1000, scoped, tag = 'operand span for operand 2']
    #allocation5 [shape = 'u8[512]{0}', space=vmem, size = 0x400, scoped, tag = 'packed  for operand 2']
    #allocation6 [shape = 's32[1]{0}', space=sflag, size = 0x4, scoped, tag = 'scoped memory for custom-call.87']
    #allocation7 [shape = 'u8[4096]{0}', space=vmem, size = 0x1000, scoped, tag = 'operand span for operand 3']
    #allocation8 [shape = 'u8[512]{0}', space=vmem, size = 0x400, scoped, tag = 'packed  for operand 3']
    #allocation9 [shape = 's32[4,128]{1,0}', space=vmem, size = 0x1000, scoped, tag = 'scratch for permutations']
    %5 = vsyncpa [#allocation6], 0
    %p7 = scmp.gt.s32.totalorder 4, 0
    // Predicated region
    $region2: #{custom-call.87} parent=1 // pred_check
      %p8 = pneg %p7
    $region3: #{custom-call.87} parent=1 // pred_check_branch
      %10 = sbr.rel (%p8) target = $region5
    $region4: #{custom-call.87} parent=1 // pred_region
      %s11 = sshra.s32 4, 3
      %p12 = scmp.gt.s32.totalorder %s11, 0
      // Predicated region
      $region6: #{custom-call.87} parent=4 // pred_check
        %p13 = pneg %p12
      $region7: #{custom-call.87} parent=4 // pred_check_branch
        %15 = sbr.rel (%p13) target = $region9
      $region8: #{custom-call.87} parent=4 // pred_region
        %s16 = ssub.s32 %s11, 1
        %s17 = smul.u32 %s16, 128
        %s18 = sshra.s32 %s17, 4
        %s19 = scalar_lea.vmem %s0, %s18
        %v20 = vld [vmem:[%s0] sm:$0xff]
        // While loop
        $region10: #{custom-call.87} parent=8 // loop_pre_header
          _
        $region11: #{custom-call.87} parent=8 // loop_header
          %s21 = sphi %s0, %s43
          %s22 = sphi [#allocation1], %s44
          %v23 = vphi %v20, %v45
          %s24 = ssub.s32 %s19, 64
          %p25 = scmp.gt.s32.totalorder %s21, %s24
        $region12: #{custom-call.87} parent=8 // loop_header_branch
          %27 = sbr.rel (%p25) target = $region16
        $region13: #{custom-call.87} parent=8 // loop_body
          %28 = vst [vmem:[%s22] sm:$0xff] %v23
          %v29 = vld [vmem:[%s21 + $0x8] sm:$0xff]
          %30 = vst [vmem:[%s22 + $0x8] sm:$0xff] %v29
          %v31 = vld [vmem:[%s21 + $0x10] sm:$0xff]
          %32 = vst [vmem:[%s22 + $0x10] sm:$0xff] %v31
          %v33 = vld [vmem:[%s21 + $0x18] sm:$0xff]
          %34 = vst [vmem:[%s22 + $0x18] sm:$0xff] %v33
          %v35 = vld [vmem:[%s21 + $0x20] sm:$0xff]
          %36 = vst [vmem:[%s22 + $0x20] sm:$0xff] %v35
          %v37 = vld [vmem:[%s21 + $0x28] sm:$0xff]
          %38 = vst [vmem:[%s22 + $0x28] sm:$0xff] %v37
          %v39 = vld [vmem:[%s21 + $0x30] sm:$0xff]
          %40 = vst [vmem:[%s22 + $0x30] sm:$0xff] %v39
          %v41 = vld [vmem:[%s21 + $0x38] sm:$0xff]
          %42 = vst [vmem:[%s22 + $0x38] sm:$0xff] %v41
        $region14: #{custom-call.87} parent=8 // loop_footer
          %s43 = scalar_lea.vmem %s21, 64
          %s44 = scalar_lea.vmem %s22, 64
          %v45 = vld [vmem:[%s21 + $0x40] sm:$0xff]
        $region15: #{custom-call.87} parent=8 // loop_footer_branch
          %46 = sbr.rel target = $region11
        $region16: #{custom-call.87} parent=8 // loop_exit
          _
        // While loop
        $region17: #{custom-call.87} parent=8 // loop_pre_header
          _
        $region18: #{custom-call.87} parent=8 // loop_header
          %s47 = sphi %s21, %s55
          %s48 = sphi %s22, %s56
          %v49 = vphi %v23, %v49
          %p50 = scmp.gt.s32.totalorder %s47, %s19
        $region19: #{custom-call.87} parent=8 // loop_header_branch
          %52 = sbr.rel (%p50) target = $region23
        $region20: #{custom-call.87} parent=8 // loop_body
          %v53 = vld [vmem:[%s47] sm:$0xff]
          %54 = vst [vmem:[%s48] sm:$0xff] %v53
        $region21: #{custom-call.87} parent=8 // loop_footer
          %s55 = scalar_lea.vmem %s47, 8
          %s56 = scalar_lea.vmem %s48, 8
        $region22: #{custom-call.87} parent=8 // loop_footer_branch
          %57 = sbr.rel target = $region18
        $region23: #{custom-call.87} parent=8 // loop_exit
          _
      $region9: #{custom-call.87} parent=4 // pred_fallthru
        _
      %s58 = sand.u32 4, 7
      %s59 = sshllo.u32 0, %s58
      %s60 = smul.u32 %s11, 128
      %s61 = sshra.s32 %s60, 4
      %s62 = scalar_lea.vmem [#allocation1], %s61
      %s63 = smul.u32 %s11, 128
      %s64 = sshra.s32 %s63, 4
      %s65 = scalar_lea.vmem %s0, %s64
      %v66 = vld [vmem:[%s65] sm:%s59]
      %67 = vst [vmem:[%s62] sm:%s59] %v66
    $region5: #{custom-call.87} parent=1 // pred_fallthru
      _
    %s69 = sshllo.u32 0, 4
    %v70 = vld [vmem:[#allocation1] sm:%s69]
    %71 = vst [vmem:[#allocation0] sm:%s69] %v70
    %v72 = vld [vmem:[#allocation0] sm:$0xff]
    %73 = vst [vmem:[#allocation2] sm:$0xff] %v72
    %74 = vst [vmem:[#allocation4] sm:$0x1] 0
    %v75 = vlaneseq
    %v76 = vshrl.u32 %v75, 7
    %v77 = vmov %v76
    %79 = vst [vmem:[#allocation9] sm:$0xff] %v77
    loop: start=0, step=1, limit=4
    $region25: #{custom-call.87} parent=1 // loop_pre_header
      _
    $region26: #{custom-call.87} parent=1 // loop_header
      %s81 = sphi 0, %s85
      %p82 = scmp.ge.s32.totalorder %s81, 4
    $region27: #{custom-call.87} parent=1 // loop_header_branch
      %84 = sbr.rel (%p82) target = $region31
    $region28: #{custom-call.87} parent=1 // loop_body
      %v86 = vstv %s81
      %v87 = vlaneseq
      %v88 = vshrl.u32 %v87, 7
      %v89 = vmov %v88
      %v90 = vld [vmem:[#allocation2] sm:$0xff]
      %v91 = vand.u32 2147483647, %v90
      %v93 = vstv %s81
      %vm94 = vcmp.ge.s32.totalorder %v89, %v93
      %vm95 = vcmp.lt.s32.totalorder %v89, 4
      %vm96 = vmand %vm94, %vm95
      %vm97 = vcmp.lt.f32.partialorder -inf, %v91
      %vm98 = vmand %vm96, %vm97
      %v99 = vsel %vm98, %v89, %v86
      %v100 = vsel %vm98, %v91, -inf
      %v101 = vrot.slane %v100, 1
      %v102 = vrot.slane %v99, 1
      %vm103 = vcmp.ge.f32.partialorder %v101, %v100
      %v104 = vsel %vm103, %v101, %v100
      %v105 = vsel %vm103, %v102, %v99
      %v106 = vrot.slane %v101, 1
      %v107 = vrot.slane %v102, 1
      %vm108 = vcmp.ge.f32.partialorder %v106, %v104
      %v109 = vsel %vm108, %v106, %v104
      %v110 = vsel %vm108, %v107, %v105
      %v111 = vrot.slane %v106, 1
      %v112 = vrot.slane %v107, 1
      %vm113 = vcmp.ge.f32.partialorder %v111, %v109
      %v114 = vsel %vm113, %v111, %v109
      %v115 = vsel %vm113, %v112, %v110
      %v116 = vrot.slane %v111, 1
      %v117 = vrot.slane %v112, 1
      %vm118 = vcmp.ge.f32.partialorder %v116, %v114
      %v119 = vsel %vm118, %v116, %v114
      %v120 = vsel %vm118, %v117, %v115
      %v121 = vrot.slane %v116, 1
      %v122 = vrot.slane %v117, 1
      %vm123 = vcmp.ge.f32.partialorder %v121, %v119
      %v124 = vsel %vm123, %v121, %v119
      %v125 = vsel %vm123, %v122, %v120
      %v126 = vrot.slane %v121, 1
      %v127 = vrot.slane %v122, 1
      %vm128 = vcmp.ge.f32.partialorder %v126, %v124
      %v129 = vsel %vm128, %v126, %v124
      %v130 = vsel %vm128, %v127, %v125
      %v131 = vrot.slane %v126, 1
      %v132 = vrot.slane %v127, 1
      %vm133 = vcmp.ge.f32.partialorder %v131, %v129
      %v134 = vsel %vm133, %v131, %v129
      %v135 = vsel %vm133, %v132, %v130
      %s136 = ssub.s32 128, %s81
      %137 = vrot.lane.b32.xlu0 %v135, %s136
      %v138 = vpop.permute.xlu0 %137
      %s139 = vtos %v138
      %v140 = vstv %s81
      %v141 = vlaneseq
      %v142 = vand.u32 %v141, 127
      %vm143 = vcmp.eq.s32.totalorder %v142, %v140
      %v144 = vstv %s139
      %v145 = vld [vmem:[#allocation4] ss:$0 sm:$0xff]
      %v146 = vsel %vm143, %v144, %v145
      %147 = vst [vmem:[#allocation4] sm:$0x1] %v146
      %s148 = scalar_lea.vmem [#allocation2], %s81
      %s149 = scalar_lea.vmem [#allocation2], %s139
      %v150 = vld [vmem:[%s148] ss:$0 sm:$0xff]
      %v151 = vld [vmem:[%s149] ss:$0 sm:$0xff]
      %152 = vst [vmem:[%s149] sm:$0x1] %v150
      %153 = vst [vmem:[%s148] sm:$0x1] %v151
      %s154 = scalar_lea.vmem [#allocation9], %s81
      %s155 = scalar_lea.vmem [#allocation9], %s139
      %v156 = vld [vmem:[%s154] ss:$0 sm:$0xff]
      %v157 = vld [vmem:[%s155] ss:$0 sm:$0xff]
      %158 = vst [vmem:[%s155] sm:$0x1] %v156
      %159 = vst [vmem:[%s154] sm:$0x1] %v157
      %vm160 = vcmp.ne.f32.partialorder %v151, 0.0
      %vm161 = vmand %vm143, %vm160
      %v162 = vsel %vm161, %v151, 1.0
      %v163 = vlaneseq
      %v164 = vand.u32 %v163, 127
      %v165 = vstv %s81
      %vm166 = vcmp.gt.s32.totalorder %v164, %v165
      %v167 = vsel %vm166, %v151, 0.0
      %v168 = vlaneseq
      %v169 = vshrl.u32 %v168, 7
      %v170 = vmov %v169
      %v171 = vld [vmem:[#allocation2] sm:$0xff]
      %v173 = vstv %s81
      %vm174 = vcmp.gt.s32.totalorder %v170, %v173
      %v175 = vsel %vm174, %v162, 1.0
      %v176 = vrcp.pop %v175
      %v177 = vmul.f32 %v171, %v176
      %vm178 = vmand %vm174, %vm143
      %v179 = vsel %vm178, %v177, 0.0
      %180 = vadd.xlane.f32.xlu0 %v179
      %v181 = vpop.xlane.xlu0 %180
      %v182 = vmul.f32 %v181, %v167
      %v183 = vsub.f32 %v177, %v182
      %184 = vst [vmem:[#allocation2] sm:$0xff] %v183
    $region29: #{custom-call.87} parent=1 // loop_footer
      %s85 = sadd.s32 1, %s81
    $region30: #{custom-call.87} parent=1 // loop_footer_branch
      %80 = sbr.rel target = $region26
    $region31: #{custom-call.87} parent=1 // loop_exit
      _
    %v185 = vld [vmem:[#allocation9] sm:$0xff]
    %s186 = scalar_lea.vmem [#allocation9], 8
    %s187 = scalar_lea.vmem [#allocation9], 16
    %s188 = scalar_lea.vmem [#allocation9], 24
    %s189 = scalar_lea.vmem [#allocation9], 32
    %s190 = scalar_lea.vmem [#allocation9], 40
    %s191 = scalar_lea.vmem [#allocation9], 48
    %s192 = scalar_lea.vmem [#allocation9], 56
    %s193 = scalar_lea.vmem [#allocation9], 64
    %s194 = scalar_lea.vmem [#allocation9], 72
    %s195 = scalar_lea.vmem [#allocation9], 80
    %s196 = scalar_lea.vmem [#allocation9], 88
    %s197 = scalar_lea.vmem [#allocation9], 96
    %s198 = scalar_lea.vmem [#allocation9], 104
    %s199 = scalar_lea.vmem [#allocation9], 112
    %s200 = scalar_lea.vmem [#allocation9], 120
    %201 = vxpose.xlu0.b32.start [1/16] %v185, 128
    %202 = vxpose.xlu0.b32.cont [2/16] 0, 128
    %203 = vxpose.xlu0.b32.cont [3/16] 0, 128
    %204 = vxpose.xlu0.b32.cont [4/16] 0, 128
    %205 = vxpose.xlu0.b32.cont [5/16] 0, 128
    %206 = vxpose.xlu0.b32.cont [6/16] 0, 128
    %207 = vxpose.xlu0.b32.cont [7/16] 0, 128
    %208 = vxpose.xlu0.b32.cont [8/16] 0, 128
    %209 = vxpose.xlu0.b32.cont [9/16] 0, 128
    %210 = vxpose.xlu0.b32.cont [10/16] 0, 128
    %211 = vxpose.xlu0.b32.cont [11/16] 0, 128
    %212 = vxpose.xlu0.b32.cont [12/16] 0, 128
    %213 = vxpose.xlu0.b32.cont [13/16] 0, 128
    %214 = vxpose.xlu0.b32.cont [14/16] 0, 128
    %215 = vxpose.xlu0.b32.cont [15/16] 0, 128
    %216 = vxpose.xlu0.b32.end [16/16] 0, 128
    %v217 = vpop.trf.xlu0
    %v218 = vpop.trf.xlu0
    %v219 = vpop.trf.xlu0
    %v220 = vpop.trf.xlu0
    %v221 = vpop.trf.xlu0
    %v222 = vpop.trf.xlu0
    %v223 = vpop.trf.xlu0
    %v224 = vpop.trf.xlu0
    %v225 = vpop.trf.xlu0
    %v226 = vpop.trf.xlu0
    %v227 = vpop.trf.xlu0
    %v228 = vpop.trf.xlu0
    %v229 = vpop.trf.xlu0
    %v230 = vpop.trf.xlu0
    %v231 = vpop.trf.xlu0
    %v232 = vpop.trf.xlu0
    %233 = vst [vmem:[#allocation7] sm:$0x1] %v217
    %s235 = sshllo.u32 0, 4
    %v237 = vld [vmem:[#allocation2] sm:%s235]
    %s238 = sshllo.u32 0, 4
    %239 = vst [vmem:[#allocation3] sm:%s238] %v237
    %s241 = sshllo.u32 0, 1
    %v243 = vld [vmem:[#allocation4] sm:%s241]
    %s244 = sshllo.u32 0, 1
    %245 = vst [vmem:[#allocation5] sm:%s244] %v243
    %s247 = sshllo.u32 0, 1
    %v249 = vld [vmem:[#allocation7] sm:%s247]
    %s250 = sshllo.u32 0, 1
    %251 = vst [vmem:[#allocation8] sm:%s250] %v249
    %p253 = scmp.gt.s32.totalorder 4, 0
    // Predicated region
    $region32: #{custom-call.87} parent=1 // pred_check
      %p254 = pneg %p253
    $region33: #{custom-call.87} parent=1 // pred_check_branch
      %256 = sbr.rel (%p254) target = $region35
    $region34: #{custom-call.87} parent=1 // pred_region
      %s257 = sshra.s32 4, 3
      %p258 = scmp.gt.s32.totalorder %s257, 0
      // Predicated region
      $region36: #{custom-call.87} parent=34 // pred_check
        %p259 = pneg %p258
      $region37: #{custom-call.87} parent=34 // pred_check_branch
        %261 = sbr.rel (%p259) target = $region39
      $region38: #{custom-call.87} parent=34 // pred_region
        %s262 = ssub.s32 %s257, 1
        %s263 = smul.u32 %s262, 128
        %s264 = sshra.s32 %s263, 4
        %s265 = scalar_lea.vmem [#allocation3], %s264
        %v266 = vld [vmem:[#allocation3] sm:$0xff]
        // While loop
        $region40: #{custom-call.87} parent=38 // loop_pre_header
          _
        $region41: #{custom-call.87} parent=38 // loop_header
          %s267 = sphi [#allocation3], %s289
          %s268 = sphi %s1, %s290
          %v269 = vphi %v266, %v291
          %s270 = ssub.s32 %s265, 64
          %p271 = scmp.gt.s32.totalorder %s267, %s270
        $region42: #{custom-call.87} parent=38 // loop_header_branch
          %273 = sbr.rel (%p271) target = $region46
        $region43: #{custom-call.87} parent=38 // loop_body
          %274 = vst [vmem:[%s268] sm:$0xff] %v269
          %v275 = vld [vmem:[%s267 + $0x8] sm:$0xff]
          %276 = vst [vmem:[%s268 + $0x8] sm:$0xff] %v275
          %v277 = vld [vmem:[%s267 + $0x10] sm:$0xff]
          %278 = vst [vmem:[%s268 + $0x10] sm:$0xff] %v277
          %v279 = vld [vmem:[%s267 + $0x18] sm:$0xff]
          %280 = vst [vmem:[%s268 + $0x18] sm:$0xff] %v279
          %v281 = vld [vmem:[%s267 + $0x20] sm:$0xff]
          %282 = vst [vmem:[%s268 + $0x20] sm:$0xff] %v281
          %v283 = vld [vmem:[%s267 + $0x28] sm:$0xff]
          %284 = vst [vmem:[%s268 + $0x28] sm:$0xff] %v283
          %v285 = vld [vmem:[%s267 + $0x30] sm:$0xff]
          %286 = vst [vmem:[%s268 + $0x30] sm:$0xff] %v285
          %v287 = vld [vmem:[%s267 + $0x38] sm:$0xff]
          %288 = vst [vmem:[%s268 + $0x38] sm:$0xff] %v287
        $region44: #{custom-call.87} parent=38 // loop_footer
          %s289 = scalar_lea.vmem %s267, 64
          %s290 = scalar_lea.vmem %s268, 64
          %v291 = vld [vmem:[%s267 + $0x40] sm:$0xff]
        $region45: #{custom-call.87} parent=38 // loop_footer_branch
          %292 = sbr.rel target = $region41
        $region46: #{custom-call.87} parent=38 // loop_exit
          _
        // While loop
        $region47: #{custom-call.87} parent=38 // loop_pre_header
          _
        $region48: #{custom-call.87} parent=38 // loop_header
          %s293 = sphi %s267, %s301
          %s294 = sphi %s268, %s302
          %v295 = vphi %v269, %v295
          %p296 = scmp.gt.s32.totalorder %s293, %s265
        $region49: #{custom-call.87} parent=38 // loop_header_branch
          %298 = sbr.rel (%p296) target = $region53
        $region50: #{custom-call.87} parent=38 // loop_body
          %v299 = vld [vmem:[%s293] sm:$0xff]
          %300 = vst [vmem:[%s294] sm:$0xff] %v299
        $region51: #{custom-call.87} parent=38 // loop_footer
          %s301 = scalar_lea.vmem %s293, 8
          %s302 = scalar_lea.vmem %s294, 8
        $region52: #{custom-call.87} parent=38 // loop_footer_branch
          %303 = sbr.rel target = $region48
        $region53: #{custom-call.87} parent=38 // loop_exit
          _
      $region39: #{custom-call.87} parent=34 // pred_fallthru
        _
      %s304 = sand.u32 4, 7
      %s305 = sshllo.u32 0, %s304
      %s306 = smul.u32 %s257, 128
      %s307 = sshra.s32 %s306, 4
      %s308 = scalar_lea.vmem %s1, %s307
      %s309 = smul.u32 %s257, 128
      %s310 = sshra.s32 %s309, 4
      %s311 = scalar_lea.vmem [#allocation3], %s310
      %v312 = vld [vmem:[%s311] sm:%s305]
      %313 = vst [vmem:[%s308] sm:%s305] %v312
    $region35: #{custom-call.87} parent=1 // pred_fallthru
      _
    // Predicated region
    $region54: #{custom-call.87} parent=1 // pred_check
      _
    $region55: #{custom-call.87} parent=1 // pred_check_branch
      %315 = sbr.rel (0) target = $region57
    $region56: #{custom-call.87} parent=1 // pred_region
      %s317 = ssub.s32 16, 16
      %318 = vsyncadd [#allocation6], %s317
      %s319 = sshll.u32 [#allocation5], 4
      %s320 = int_to_ptr.vmem [resolvable:$true] %s319
      %322 = dma.vmem_to_hbm [thread:$0]  %s320, 16, %s2, [#allocation6]
    $region57: #{custom-call.87} parent=1 // pred_fallthru
      _
    // Predicated region
    $region58: #{custom-call.87} parent=1 // pred_check
      _
    $region59: #{custom-call.87} parent=1 // pred_check_branch
      %324 = sbr.rel (0) target = $region61
    $region60: #{custom-call.87} parent=1 // pred_region
      %p326 = scmp.gt.s32.totalorder 1, 0
      // Predicated region
      $region62: #{custom-call.87} parent=60 // pred_check
        %p327 = pneg %p326
      $region63: #{custom-call.87} parent=60 // pred_check_branch
        %329 = sbr.rel (%p327) target = $region65
      $region64: #{custom-call.87} parent=60 // pred_region
        %s330 = sshra.s32 1, 3
        %p331 = scmp.gt.s32.totalorder %s330, 0
        // Predicated region
        $region66: #{custom-call.87} parent=64 // pred_check
          %p332 = pneg %p331
        $region67: #{custom-call.87} parent=64 // pred_check_branch
          %334 = sbr.rel (%p332) target = $region69
        $region68: #{custom-call.87} parent=64 // pred_region
          %s335 = ssub.s32 %s330, 1
          %s336 = smul.u32 %s335, 128
          %s337 = sshra.s32 %s336, 4
          %s338 = scalar_lea.vmem [#allocation8], %s337
          %v339 = vld [vmem:[#allocation8] sm:$0xff]
          // While loop
          $region70: #{custom-call.87} parent=68 // loop_pre_header
            _
          $region71: #{custom-call.87} parent=68 // loop_header
            %s340 = sphi [#allocation8], %s362
            %s341 = sphi %s3, %s363
            %v342 = vphi %v339, %v364
            %s343 = ssub.s32 %s338, 64
            %p344 = scmp.gt.s32.totalorder %s340, %s343
          $region72: #{custom-call.87} parent=68 // loop_header_branch
            %346 = sbr.rel (%p344) target = $region76
          $region73: #{custom-call.87} parent=68 // loop_body
            %347 = vst [vmem:[%s341] sm:$0xff] %v342
            %v348 = vld [vmem:[%s340 + $0x8] sm:$0xff]
            %349 = vst [vmem:[%s341 + $0x8] sm:$0xff] %v348
            %v350 = vld [vmem:[%s340 + $0x10] sm:$0xff]
            %351 = vst [vmem:[%s341 + $0x10] sm:$0xff] %v350
            %v352 = vld [vmem:[%s340 + $0x18] sm:$0xff]
            %353 = vst [vmem:[%s341 + $0x18] sm:$0xff] %v352
            %v354 = vld [vmem:[%s340 + $0x20] sm:$0xff]
            %355 = vst [vmem:[%s341 + $0x20] sm:$0xff] %v354
            %v356 = vld [vmem:[%s340 + $0x28] sm:$0xff]
            %357 = vst [vmem:[%s341 + $0x28] sm:$0xff] %v356
            %v358 = vld [vmem:[%s340 + $0x30] sm:$0xff]
            %359 = vst [vmem:[%s341 + $0x30] sm:$0xff] %v358
            %v360 = vld [vmem:[%s340 + $0x38] sm:$0xff]
            %361 = vst [vmem:[%s341 + $0x38] sm:$0xff] %v360
          $region74: #{custom-call.87} parent=68 // loop_footer
            %s362 = scalar_lea.vmem %s340, 64
            %s363 = scalar_lea.vmem %s341, 64
            %v364 = vld [vmem:[%s340 + $0x40] sm:$0xff]
          $region75: #{custom-call.87} parent=68 // loop_footer_branch
            %365 = sbr.rel target = $region71
          $region76: #{custom-call.87} parent=68 // loop_exit
            _
          // While loop
          $region77: #{custom-call.87} parent=68 // loop_pre_header
            _
          $region78: #{custom-call.87} parent=68 // loop_header
            %s366 = sphi %s340, %s374
            %s367 = sphi %s341, %s375
            %v368 = vphi %v342, %v368
            %p369 = scmp.gt.s32.totalorder %s366, %s338
          $region79: #{custom-call.87} parent=68 // loop_header_branch
            %371 = sbr.rel (%p369) target = $region83
          $region80: #{custom-call.87} parent=68 // loop_body
            %v372 = vld [vmem:[%s366] sm:$0xff]
            %373 = vst [vmem:[%s367] sm:$0xff] %v372
          $region81: #{custom-call.87} parent=68 // loop_footer
            %s374 = scalar_lea.vmem %s366, 8
            %s375 = scalar_lea.vmem %s367, 8
          $region82: #{custom-call.87} parent=68 // loop_footer_branch
            %376 = sbr.rel target = $region78
          $region83: #{custom-call.87} parent=68 // loop_exit
            _
        $region69: #{custom-call.87} parent=64 // pred_fallthru
          _
        %s377 = sand.u32 1, 7
        %s378 = sshllo.u32 0, %s377
        %s379 = smul.u32 %s330, 128
        %s380 = sshra.s32 %s379, 4
        %s381 = scalar_lea.vmem %s3, %s380
        %s382 = smul.u32 %s330, 128
        %s383 = sshra.s32 %s382, 4
        %s384 = scalar_lea.vmem [#allocation8], %s383
        %v385 = vld [vmem:[%s384] sm:%s378]
        %386 = vst [vmem:[%s381] sm:%s378] %v385
      $region65: #{custom-call.87} parent=60 // pred_fallthru
        _
    $region61: #{custom-call.87} parent=1 // pred_fallthru
      _
    // Predicated region
    $region84: #{custom-call.87} parent=1 // pred_check
      _
    $region85: #{custom-call.87} parent=1 // pred_check_branch
      %388 = sbr.rel (0) target = $region87
    $region86: #{custom-call.87} parent=1 // pred_region
      %389 = dma.done [#allocation6], 16
    $region87: #{custom-call.87} parent=1 // pred_fallthru
      _
    // Predicated region
    $region88: #{custom-call.87} parent=1 // pred_check
      _
    $region89: #{custom-call.87} parent=1 // pred_check_branch
      %391 = sbr.rel (0) target = $region91
    $region90: #{custom-call.87} parent=1 // pred_region
      _
    $region91: #{custom-call.87} parent=1 // pred_fallthru
      _
    %392 = vsyncpa [#allocation6], 1

// kernel: custom-call.89
$region0: #{custom-call.89}
  %s0 = inlined_call_operand.vmem [shape: f32[1,4,4], index: 0, kind: input, shape index: {}]
  %s1 = inlined_call_operand.vmem [shape: f32[1,4,4], index: 1, kind: output, shape index: {}]
  $region1: #{custom-call.89} parent=0
    #allocation0 [shape = 'u8[4096]{0}', space=vmem, size = 0x1000, scoped, tag = 'operand span for operand 0']
    #allocation1 [shape = 'u8[2048]{0}', space=vmem, size = 0x800, scoped, tag = 'packed  for operand 0']
    #allocation2 [shape = 'u8[4096]{0}', space=vmem, size = 0x1000, scoped, tag = 'operand span for operand 1']
    #allocation3 [shape = 'u8[2048]{0}', space=vmem, size = 0x800, scoped, tag = 'packed  for operand 1']
    #allocation4 [shape = 'f32[4,4]{1,0}', space=vmem, size = 0x1000, scoped, tag = 'rescaled input a']
    // Predicated region
    $region2: #{custom-call.89} parent=1 // pred_check
      _
    $region3: #{custom-call.89} parent=1 // pred_check_branch
      %3 = sbr.rel (0) target = $region5
    $region4: #{custom-call.89} parent=1 // pred_region
      // Predicated region
      $region6: #{custom-call.89} parent=4 // pred_check
        _
      $region7: #{custom-call.89} parent=4 // pred_check_branch
        %5 = sbr.rel target = $region9
      $region8: #{custom-call.89} parent=4 // pred_region
        // Predicated region
        $region21: #{custom-call.89} parent=8 // pred_check
          _
        $region22: #{custom-call.89} parent=8 // pred_check_branch
          %20 = sbr.rel (0) target = $region24
        $region23: #{custom-call.89} parent=8 // pred_region
          loop: start=0, step=1, limit=1
          $region25: #{custom-call.89} parent=23 // loop_pre_header
            _
          $region26: #{custom-call.89} parent=23 // loop_header
            %s23 = sphi 0, %s27
            %p24 = scmp.ge.s32.totalorder %s23, 1
            %s28 = sphi %s0, %s0
            %s29 = sphi [#allocation1], [#allocation1]
          $region27: #{custom-call.89} parent=23 // loop_header_branch
            %26 = sbr.rel (%p24) target = $region31
          $region28: #{custom-call.89} parent=23 // loop_body
            %v30 = vld [vmem:[%s28] sm:$0xf]
            %31 = vst [vmem:[%s29] sm:$0xf] %v30
          $region29: #{custom-call.89} parent=23 // loop_footer
            %s27 = sadd.s32 1, %s23
          $region30: #{custom-call.89} parent=23 // loop_footer_branch
            %22 = sbr.rel target = $region26
          $region31: #{custom-call.89} parent=23 // loop_exit
            _
        $region24: #{custom-call.89} parent=8 // pred_fallthru
          _
      $region9: #{custom-call.89} parent=4 // pred_fallthru
        _
      // Predicated region
      $region10: #{custom-call.89} parent=4 // pred_check
        _
      $region11: #{custom-call.89} parent=4 // pred_check_branch
        %7 = sbr.rel (0) target = $region13
      $region12: #{custom-call.89} parent=4 // pred_region
        loop: start=0, step=1, limit=1
        $region14: #{custom-call.89} parent=12 // loop_pre_header
          _
        $region15: #{custom-call.89} parent=12 // loop_header
          %s10 = sphi 0, %s14
          %p11 = scmp.ge.s32.totalorder %s10, 1
          %s15 = sphi %s0, %s0
          %s16 = sphi [#allocation1], [#allocation1]
        $region16: #{custom-call.89} parent=12 // loop_header_branch
          %13 = sbr.rel (%p11) target = $region20
        $region17: #{custom-call.89} parent=12 // loop_body
          %v17 = vld [vmem:[%s15] sm:$0xf]
          %18 = vst [vmem:[%s16] sm:$0xf] %v17
        $region18: #{custom-call.89} parent=12 // loop_footer
          %s14 = sadd.s32 1, %s10
        $region19: #{custom-call.89} parent=12 // loop_footer_branch
          %9 = sbr.rel target = $region15
        $region20: #{custom-call.89} parent=12 // loop_exit
          _
      $region13: #{custom-call.89} parent=4 // pred_fallthru
        _
    $region5: #{custom-call.89} parent=1 // pred_fallthru
      _
    %32 = vnop
    %s34 = sshllo.u32 0, 4
    %v35 = vld [vmem:[#allocation1] sm:%s34]
    %36 = vst [vmem:[#allocation0] sm:%s34] %v35
    %v37 = vlaneseq
    %v38 = vand.u32 %v37, 127
    %vm39 = vcmp.lt.s32.totalorder %v38, 4
    %v40 = vlaneseq
    %v41 = vshrl.u32 %v40, 7
    %vm43 = vcmp.eq.s32.totalorder %v41, %v38
    %v44 = vld [vmem:[#allocation0] sm:$0xff]
    %v45 = vsel %vm43, %v44, 0.0
    %46 = vadd.xlane.f32.xlu0 %v45
    %v47 = vpop.xlane.xlu0 %46
    %vm48 = vcmp.ge.s32.totalorder %v41, %v38
    %vm49 = vmand %vm48, %vm39
    %v50 = vsel %vm49, %v44, 0.0
    %v51 = vrcp.pop %v47
    %v52 = vmul.f32 %v50, %v51
    %53 = vst [vmem:[#allocation4] sm:$0xff] %v52
    %v54 = vlaneseq
    %v55 = vand.u32 %v54, 127
    %v56 = vlaneseq
    %v57 = vshrl.u32 %v56, 7
    %vm59 = vcmp.eq.s32.totalorder %v55, %v57
    %v60 = vlaneseq
    %v61 = vand.u32 %v60, 127
    %vm62 = vcmp.eq.s32.totalorder %v61, 0
    %v63 = vsel %vm62, 1.0, -1.0
    %v64 = vsel %vm59, %v63, 0.0
    %s65 = scalar_lea.vmem [#allocation4], 1
    %v66 = vld [vmem:[%s65] ss:$0 sm:$0xff]
    %v67 = vxor.u32 %v66, 2147483648
    %v68 = vlaneseq
    %v69 = vand.u32 %v68, 127
    %vm70 = vcmp.eq.s32.totalorder %v69, 1
    %v71 = vmul.f32 %v67, %v64
    %72 = vadd.xlane.f32.xlu0 %v71
    %v73 = vpop.xlane.xlu0 %72
    %v74 = vsel %vm70, %v73, %v64
    %s75 = scalar_lea.vmem [#allocation4], 2
    %v76 = vld [vmem:[%s75] ss:$0 sm:$0xff]
    %v77 = vxor.u32 %v76, 2147483648
    %v78 = vlaneseq
    %v79 = vand.u32 %v78, 127
    %vm80 = vcmp.eq.s32.totalorder %v79, 2
    %v81 = vmul.f32 %v77, %v74
    %82 = vadd.xlane.f32.xlu0 %v81
    %v83 = vpop.xlane.xlu0 %82
    %v84 = vsel %vm80, %v83, %v74
    %s85 = scalar_lea.vmem [#allocation4], 3
    %v86 = vld [vmem:[%s85] ss:$0 sm:$0xff]
    %v87 = vxor.u32 %v86, 2147483648
    %v88 = vlaneseq
    %v89 = vand.u32 %v88, 127
    %vm90 = vcmp.eq.s32.totalorder %v89, 3
    %v91 = vmul.f32 %v87, %v84
    %92 = vadd.xlane.f32.xlu0 %v91
    %v93 = vpop.xlane.xlu0 %92
    %v94 = vsel %vm90, %v93, %v84
    %v95 = vrcp.pop %v47
    %v96 = vmul.f32 %v94, %v95
    %vm97 = vweird.f32 %v47
    %v98 = vsel %vm97, %v94, %v96
    %99 = vst [vmem:[#allocation2] sm:$0xff] %v98
    %s101 = sshllo.u32 0, 4
    %v103 = vld [vmem:[#allocation2] sm:%s101]
    %s104 = sshllo.u32 0, 4
    %105 = vst [vmem:[#allocation3] sm:%s104] %v103
    // Predicated region
    $region32: #{custom-call.89} parent=1 // pred_check
      _
    $region33: #{custom-call.89} parent=1 // pred_check_branch
      %107 = sbr.rel (0) target = $region35
    $region34: #{custom-call.89} parent=1 // pred_region
      // Predicated region
      $region36: #{custom-call.89} parent=34 // pred_check
        _
      $region37: #{custom-call.89} parent=34 // pred_check_branch
        %109 = sbr.rel target = $region39
      $region38: #{custom-call.89} parent=34 // pred_region
        // Predicated region
        $region51: #{custom-call.89} parent=38 // pred_check
          _
        $region52: #{custom-call.89} parent=38 // pred_check_branch
          %124 = sbr.rel (0) target = $region54
        $region53: #{custom-call.89} parent=38 // pred_region
          loop: start=0, step=1, limit=1
          $region55: #{custom-call.89} parent=53 // loop_pre_header
            _
          $region56: #{custom-call.89} parent=53 // loop_header
            %s127 = sphi 0, %s131
            %p128 = scmp.ge.s32.totalorder %s127, 1
            %s132 = sphi [#allocation3], [#allocation3]
            %s133 = sphi %s1, %s1
          $region57: #{custom-call.89} parent=53 // loop_header_branch
            %130 = sbr.rel (%p128) target = $region61
          $region58: #{custom-call.89} parent=53 // loop_body
            %v134 = vld [vmem:[%s132] sm:$0xf]
            %135 = vst [vmem:[%s133] sm:$0xf] %v134
          $region59: #{custom-call.89} parent=53 // loop_footer
            %s131 = sadd.s32 1, %s127
          $region60: #{custom-call.89} parent=53 // loop_footer_branch
            %126 = sbr.rel target = $region56
          $region61: #{custom-call.89} parent=53 // loop_exit
            _
        $region54: #{custom-call.89} parent=38 // pred_fallthru
          _
      $region39: #{custom-call.89} parent=34 // pred_fallthru
        _
      // Predicated region
      $region40: #{custom-call.89} parent=34 // pred_check
        _
      $region41: #{custom-call.89} parent=34 // pred_check_branch
        %111 = sbr.rel (0) target = $region43
      $region42: #{custom-call.89} parent=34 // pred_region
        loop: start=0, step=1, limit=1
        $region44: #{custom-call.89} parent=42 // loop_pre_header
          _
        $region45: #{custom-call.89} parent=42 // loop_header
          %s114 = sphi 0, %s118
          %p115 = scmp.ge.s32.totalorder %s114, 1
          %s119 = sphi [#allocation3], [#allocation3]
          %s120 = sphi %s1, %s1
        $region46: #{custom-call.89} parent=42 // loop_header_branch
          %117 = sbr.rel (%p115) target = $region50
        $region47: #{custom-call.89} parent=42 // loop_body
          %v121 = vld [vmem:[%s119] sm:$0xf]
          %122 = vst [vmem:[%s120] sm:$0xf] %v121
        $region48: #{custom-call.89} parent=42 // loop_footer
          %s118 = sadd.s32 1, %s114
        $region49: #{custom-call.89} parent=42 // loop_footer_branch
          %113 = sbr.rel target = $region45
        $region50: #{custom-call.89} parent=42 // loop_exit
          _
      $region43: #{custom-call.89} parent=34 // pred_fallthru
        _
    $region35: #{custom-call.89} parent=1 // pred_fallthru
      _
    %136 = vnop

// kernel: custom-call.88
$region0: #{custom-call.88}
  %s0 = inlined_call_operand.vmem [shape: f32[1,4,4], index: 0, kind: input, shape index: {}]
  %s1 = inlined_call_operand.vmem [shape: f32[1,4,4], index: 1, kind: output, shape index: {}]
  $region1: #{custom-call.88} parent=0
    #allocation0 [shape = 'u8[4096]{0}', space=vmem, size = 0x1000, scoped, tag = 'operand span for operand 0']
    #allocation1 [shape = 'u8[2048]{0}', space=vmem, size = 0x800, scoped, tag = 'packed  for operand 0']
    #allocation2 [shape = 'u8[4096]{0}', space=vmem, size = 0x1000, scoped, tag = 'operand span for operand 1']
    #allocation3 [shape = 'u8[2048]{0}', space=vmem, size = 0x800, scoped, tag = 'packed  for operand 1']
    #allocation4 [shape = 'f32[4,4]{1,0}', space=vmem, size = 0x1000, scoped, tag = 'rescaled input a']
    // Predicated region
    $region2: #{custom-call.88} parent=1 // pred_check
      _
    $region3: #{custom-call.88} parent=1 // pred_check_branch
      %3 = sbr.rel (0) target = $region5
    $region4: #{custom-call.88} parent=1 // pred_region
      // Predicated region
      $region6: #{custom-call.88} parent=4 // pred_check
        _
      $region7: #{custom-call.88} parent=4 // pred_check_branch
        %5 = sbr.rel target = $region9
      $region8: #{custom-call.88} parent=4 // pred_region
        // Predicated region
        $region21: #{custom-call.88} parent=8 // pred_check
          _
        $region22: #{custom-call.88} parent=8 // pred_check_branch
          %20 = sbr.rel (0) target = $region24
        $region23: #{custom-call.88} parent=8 // pred_region
          loop: start=0, step=1, limit=1
          $region25: #{custom-call.88} parent=23 // loop_pre_header
            _
          $region26: #{custom-call.88} parent=23 // loop_header
            %s23 = sphi 0, %s27
            %p24 = scmp.ge.s32.totalorder %s23, 1
            %s28 = sphi %s0, %s0
            %s29 = sphi [#allocation1], [#allocation1]
          $region27: #{custom-call.88} parent=23 // loop_header_branch
            %26 = sbr.rel (%p24) target = $region31
          $region28: #{custom-call.88} parent=23 // loop_body
            %v30 = vld [vmem:[%s28] sm:$0xf]
            %31 = vst [vmem:[%s29] sm:$0xf] %v30
          $region29: #{custom-call.88} parent=23 // loop_footer
            %s27 = sadd.s32 1, %s23
          $region30: #{custom-call.88} parent=23 // loop_footer_branch
            %22 = sbr.rel target = $region26
          $region31: #{custom-call.88} parent=23 // loop_exit
            _
        $region24: #{custom-call.88} parent=8 // pred_fallthru
          _
      $region9: #{custom-call.88} parent=4 // pred_fallthru
        _
      // Predicated region
      $region10: #{custom-call.88} parent=4 // pred_check
        _
      $region11: #{custom-call.88} parent=4 // pred_check_branch
        %7 = sbr.rel (0) target = $region13
      $region12: #{custom-call.88} parent=4 // pred_region
        loop: start=0, step=1, limit=1
        $region14: #{custom-call.88} parent=12 // loop_pre_header
          _
        $region15: #{custom-call.88} parent=12 // loop_header
          %s10 = sphi 0, %s14
          %p11 = scmp.ge.s32.totalorder %s10, 1
          %s15 = sphi %s0, %s0
          %s16 = sphi [#allocation1], [#allocation1]
        $region16: #{custom-call.88} parent=12 // loop_header_branch
          %13 = sbr.rel (%p11) target = $region20
        $region17: #{custom-call.88} parent=12 // loop_body
          %v17 = vld [vmem:[%s15] sm:$0xf]
          %18 = vst [vmem:[%s16] sm:$0xf] %v17
        $region18: #{custom-call.88} parent=12 // loop_footer
          %s14 = sadd.s32 1, %s10
        $region19: #{custom-call.88} parent=12 // loop_footer_branch
          %9 = sbr.rel target = $region15
        $region20: #{custom-call.88} parent=12 // loop_exit
          _
      $region13: #{custom-call.88} parent=4 // pred_fallthru
        _
    $region5: #{custom-call.88} parent=1 // pred_fallthru
      _
    %32 = vnop
    %s34 = sshllo.u32 0, 4
    %v35 = vld [vmem:[#allocation1] sm:%s34]
    %36 = vst [vmem:[#allocation0] sm:%s34] %v35
    %v37 = vlaneseq
    %v38 = vand.u32 %v37, 127
    %vm39 = vcmp.lt.s32.totalorder %v38, 4
    %v40 = vlaneseq
    %v41 = vshrl.u32 %v40, 7
    %vm43 = vcmp.eq.s32.totalorder %v41, %v38
    %v44 = vld [vmem:[#allocation0] sm:$0xff]
    %v45 = vsel %vm43, %v44, 0.0
    %46 = vadd.xlane.f32.xlu0 %v45
    %v47 = vpop.xlane.xlu0 %46
    %vm48 = vcmp.le.s32.totalorder %v41, %v38
    %vm49 = vmand %vm48, %vm39
    %v50 = vsel %vm49, %v44, 0.0
    %v51 = vrcp.pop %v47
    %v52 = vmul.f32 %v50, %v51
    %53 = vst [vmem:[#allocation4] sm:$0xff] %v52
    %v54 = vlaneseq
    %v55 = vand.u32 %v54, 127
    %v56 = vlaneseq
    %v57 = vshrl.u32 %v56, 7
    %vm59 = vcmp.eq.s32.totalorder %v55, %v57
    %v60 = vlaneseq
    %v61 = vand.u32 %v60, 127
    %vm62 = vcmp.eq.s32.totalorder %v61, 3
    %v63 = vsel %vm62, 1.0, -1.0
    %v64 = vsel %vm59, %v63, 0.0
    %s65 = scalar_lea.vmem [#allocation4], 2
    %v66 = vld [vmem:[%s65] ss:$0 sm:$0xff]
    %v67 = vxor.u32 %v66, 2147483648
    %v68 = vlaneseq
    %v69 = vand.u32 %v68, 127
    %vm70 = vcmp.eq.s32.totalorder %v69, 2
    %v71 = vmul.f32 %v67, %v64
    %72 = vadd.xlane.f32.xlu0 %v71
    %v73 = vpop.xlane.xlu0 %72
    %v74 = vsel %vm70, %v73, %v64
    %s75 = scalar_lea.vmem [#allocation4], 1
    %v76 = vld [vmem:[%s75] ss:$0 sm:$0xff]
    %v77 = vxor.u32 %v76, 2147483648
    %v78 = vlaneseq
    %v79 = vand.u32 %v78, 127
    %vm80 = vcmp.eq.s32.totalorder %v79, 1
    %v81 = vmul.f32 %v77, %v74
    %82 = vadd.xlane.f32.xlu0 %v81
    %v83 = vpop.xlane.xlu0 %82
    %v84 = vsel %vm80, %v83, %v74
    %v85 = vld [vmem:[#allocation4] ss:$0 sm:$0xff]
    %v86 = vxor.u32 %v85, 2147483648
    %v87 = vlaneseq
    %v88 = vand.u32 %v87, 127
    %vm89 = vcmp.eq.s32.totalorder %v88, 0
    %v90 = vmul.f32 %v86, %v84
    %91 = vadd.xlane.f32.xlu0 %v90
    %v92 = vpop.xlane.xlu0 %91
    %v93 = vsel %vm89, %v92, %v84
    %v94 = vrcp.pop %v47
    %v95 = vmul.f32 %v93, %v94
    %vm96 = vweird.f32 %v47
    %v97 = vsel %vm96, %v93, %v95
    %98 = vst [vmem:[#allocation2] sm:$0xff] %v97
    %s100 = sshllo.u32 0, 4
    %v102 = vld [vmem:[#allocation2] sm:%s100]
    %s103 = sshllo.u32 0, 4
    %104 = vst [vmem:[#allocation3] sm:%s103] %v102
    // Predicated region
    $region32: #{custom-call.88} parent=1 // pred_check
      _
    $region33: #{custom-call.88} parent=1 // pred_check_branch
      %106 = sbr.rel (0) target = $region35
    $region34: #{custom-call.88} parent=1 // pred_region
      // Predicated region
      $region36: #{custom-call.88} parent=34 // pred_check
        _
      $region37: #{custom-call.88} parent=34 // pred_check_branch
        %108 = sbr.rel target = $region39
      $region38: #{custom-call.88} parent=34 // pred_region
        // Predicated region
        $region51: #{custom-call.88} parent=38 // pred_check
          _
        $region52: #{custom-call.88} parent=38 // pred_check_branch
          %123 = sbr.rel (0) target = $region54
        $region53: #{custom-call.88} parent=38 // pred_region
          loop: start=0, step=1, limit=1
          $region55: #{custom-call.88} parent=53 // loop_pre_header
            _
          $region56: #{custom-call.88} parent=53 // loop_header
            %s126 = sphi 0, %s130
            %p127 = scmp.ge.s32.totalorder %s126, 1
            %s131 = sphi [#allocation3], [#allocation3]
            %s132 = sphi %s1, %s1
          $region57: #{custom-call.88} parent=53 // loop_header_branch
            %129 = sbr.rel (%p127) target = $region61
          $region58: #{custom-call.88} parent=53 // loop_body
            %v133 = vld [vmem:[%s131] sm:$0xf]
            %134 = vst [vmem:[%s132] sm:$0xf] %v133
          $region59: #{custom-call.88} parent=53 // loop_footer
            %s130 = sadd.s32 1, %s126
          $region60: #{custom-call.88} parent=53 // loop_footer_branch
            %125 = sbr.rel target = $region56
          $region61: #{custom-call.88} parent=53 // loop_exit
            _
        $region54: #{custom-call.88} parent=38 // pred_fallthru
          _
      $region39: #{custom-call.88} parent=34 // pred_fallthru
        _
      // Predicated region
      $region40: #{custom-call.88} parent=34 // pred_check
        _
      $region41: #{custom-call.88} parent=34 // pred_check_branch
        %110 = sbr.rel (0) target = $region43
      $region42: #{custom-call.88} parent=34 // pred_region
        loop: start=0, step=1, limit=1
        $region44: #{custom-call.88} parent=42 // loop_pre_header
          _
        $region45: #{custom-call.88} parent=42 // loop_header
          %s113 = sphi 0, %s117
          %p114 = scmp.ge.s32.totalorder %s113, 1
          %s118 = sphi [#allocation3], [#allocation3]
          %s119 = sphi %s1, %s1
        $region46: #{custom-call.88} parent=42 // loop_header_branch
          %116 = sbr.rel (%p114) target = $region50
        $region47: #{custom-call.88} parent=42 // loop_body
          %v120 = vld [vmem:[%s118] sm:$0xf]
          %121 = vst [vmem:[%s119] sm:$0xf] %v120
        $region48: #{custom-call.88} parent=42 // loop_footer
          %s117 = sadd.s32 1, %s113
        $region49: #{custom-call.88} parent=42 // loop_footer_branch
          %112 = sbr.rel target = $region45
        $region50: #{custom-call.88} parent=42 // loop_exit
          _
      $region43: #{custom-call.88} parent=34 // pred_fallthru
        _
    $region35: #{custom-call.88} parent=1 // pred_fallthru
      _
    %135 = vnop

// kernel: metaoptnet_forward.1
$region0: #{metaoptnet_forward.1}
  #allocation0 [shape = 'u32[]', space=smem, size = 0x4, offset = 0x4, fixed_abs, tag = 'smem constant byte address 0x4 - core index']
  #allocation1 [shape = 'u32[144,128]{1,0:T(1,128)}', space=vmem, size = 0x12000, scoped, tag = 'internal scratch']
  #allocation2 [shape = 'f32[136,128]{1,0:T(8,128)}', space=vmem, size = 0x11000, scoped, tag = 'scratch operand']
  %s0 = inlined_call_operand.vmem [shape: bf16[136,1024], index: 0, kind: input, shape index: {}]
  %s1 = inlined_call_operand.vmem [shape: bf16[1024,128], index: 1, kind: input, shape index: {}]
  %s2 = inlined_call_operand.vmem [shape: f32[1,128], index: 2, kind: input, shape index: {}]
  %s3 = inlined_call_operand.vmem [shape: f32[128,128], index: 3, kind: output, shape index: {0}]
  %s4 = inlined_call_operand.vmem [shape: f32[8,128], index: 4, kind: output, shape index: {1}]
  %5 = xla_tuple %s3, %s4
  %s6 = sld [smem:[#allocation0]]
  $region84: #{metaoptnet_forward.1} parent=0
    _
  %s8 = ssub.s32 1, %s6
  %s9 = scalar_select 0, %s8, %s6
  $region1: #{metaoptnet_forward.1} parent=0
    #allocation3 [shape = 'u8[278528]{0}', space=vmem, size = 0x44000, scoped, tag = 'input window, operand 0']
    loop: start=0, step=1, limit=4
    $region2: #{metaoptnet_forward.1} parent=1 // loop_pre_header
      _
    $region3: #{metaoptnet_forward.1} parent=1 // loop_header
      %s11 = sphi 0, %s15
      %p12 = scmp.ge.s32.totalorder %s11, 4
      %s21 = sphi 0, %s23
      %s24 = sphi 0, %s21
      %s25 = sphi 0, %s24
      %s41 = sphi 0, %s25
      %s47 = sphi 0, %s49
      %s50 = sphi 0, %s47
      %s51 = sphi 0, %s50
      %s67 = sphi 0, %s51
      %s71 = sphi 0, %s71
      %s73 = sphi 0, %s71
      %s74 = sphi 0, %s73
      %s88 = sphi 0, %s74
      %s92 = sphi 0, %s92
      %s94 = sphi 0, %s92
      %s95 = sphi 0, %s94
      %s109 = sphi 0, %s95
      %s113 = sphi 0, %s113
      %s115 = sphi 0, %s113
      %s116 = sphi 0, %s115
      %s130 = sphi 0, %s116
    $region4: #{metaoptnet_forward.1} parent=1 // loop_header_branch
      %14 = sbr.rel (%p12) target = $region8
    $region5: #{metaoptnet_forward.1} parent=1 // loop_body
      %s16 = ssub.s32 %s11, 1
      %s17 = ssub.s32 %s11, 2
      %s18 = sadd.s32 %s11, 1
      %s19 = ssub.s32 %s11, %s18
      %p20 = scmp.eq.s32.totalorder %s19, 0
      %s22 = sadd.s32 %s21, 1
      %s23 = scalar_select %p20, %s21, %s22
      %p26 = pneg %p20
      %p27 = scmp.eq.s32.totalorder %s11, 1
      %p28 = por %p26, %p27
      %p29 = scmp.ne.s32.totalorder %s21, %s24
      %p30 = scmp.eq.s32.totalorder %s11, 0
      %p31 = por %p29, %p30
      %p32 = scmp.ne.s32.totalorder %s21, %s24
      %p33 = scmp.eq.s32.totalorder %s16, 1
      %p34 = por %p32, %p33
      %p35 = scmp.ne.s32.totalorder %s24, %s25
      %p36 = scmp.eq.s32.totalorder %s16, 0
      %p37 = por %p35, %p36
      %p38 = scmp.ne.s32.totalorder %s24, %s25
      %p39 = scmp.eq.s32.totalorder %s17, 1
      %p40 = por %p38, %p39
      %p42 = scmp.ne.s32.totalorder %s25, %s41
      %p43 = scmp.eq.s32.totalorder %s17, 0
      %p44 = por %p42, %p43
      %s45 = ssub.s32 %s11, %s18
      %p46 = scmp.eq.s32.totalorder %s45, 0
      %s48 = sadd.s32 %s47, 1
      %s49 = scalar_select %p46, %s47, %s48
      %p52 = pneg %p46
      %p53 = scmp.eq.s32.totalorder %s11, 1
      %p54 = por %p52, %p53
      %p55 = scmp.ne.s32.totalorder %s47, %s50
      %p56 = scmp.eq.s32.totalorder %s11, 0
      %p57 = por %p55, %p56
      %p58 = scmp.ne.s32.totalorder %s47, %s50
      %p59 = scmp.eq.s32.totalorder %s16, 1
      %p60 = por %p58, %p59
      %p61 = scmp.ne.s32.totalorder %s50, %s51
      %p62 = scmp.eq.s32.totalorder %s16, 0
      %p63 = por %p61, %p62
      %p64 = scmp.ne.s32.totalorder %s50, %s51
      %p65 = scmp.eq.s32.totalorder %s17, 1
      %p66 = por %p64, %p65
      %p68 = scmp.ne.s32.totalorder %s51, %s67
      %p69 = scmp.eq.s32.totalorder %s17, 0
      %p70 = por %p68, %p69
      %s72 = sadd.s32 %s71, 1
      %p75 = scmp.eq.s32.totalorder %s11, 1
      %p76 = scmp.ne.s32.totalorder %s71, %s73
      %p77 = scmp.eq.s32.totalorder %s11, 0
      %p78 = por %p76, %p77
      %p79 = scmp.ne.s32.totalorder %s71, %s73
      %p80 = scmp.eq.s32.totalorder %s16, 1
      %p81 = por %p79, %p80
      %p82 = scmp.ne.s32.totalorder %s73, %s74
      %p83 = scmp.eq.s32.totalorder %s16, 0
      %p84 = por %p82, %p83
      %p85 = scmp.ne.s32.totalorder %s73, %s74
      %p86 = scmp.eq.s32.totalorder %s17, 1
      %p87 = por %p85, %p86
      %p89 = scmp.ne.s32.totalorder %s74, %s88
      %p90 = scmp.eq.s32.totalorder %s17, 0
      %p91 = por %p89, %p90
      %s93 = sadd.s32 %s92, 1
      %p96 = scmp.eq.s32.totalorder %s11, 1
      %p97 = scmp.ne.s32.totalorder %s92, %s94
      %p98 = scmp.eq.s32.totalorder %s11, 0
      %p99 = por %p97, %p98
      %p100 = scmp.ne.s32.totalorder %s92, %s94
      %p101 = scmp.eq.s32.totalorder %s16, 1
      %p102 = por %p100, %p101
      %p103 = scmp.ne.s32.totalorder %s94, %s95
      %p104 = scmp.eq.s32.totalorder %s16, 0
      %p105 = por %p103, %p104
      %p106 = scmp.ne.s32.totalorder %s94, %s95
      %p107 = scmp.eq.s32.totalorder %s17, 1
      %p108 = por %p106, %p107
      %p110 = scmp.ne.s32.totalorder %s95, %s109
      %p111 = scmp.eq.s32.totalorder %s17, 0
      %p112 = por %p110, %p111
      %s114 = sadd.s32 %s113, 1
      %p117 = scmp.eq.s32.totalorder %s11, 1
      %p118 = scmp.ne.s32.totalorder %s113, %s115
      %p119 = scmp.eq.s32.totalorder %s11, 0
      %p120 = por %p118, %p119
      %p121 = scmp.ne.s32.totalorder %s113, %s115
      %p122 = scmp.eq.s32.totalorder %s16, 1
      %p123 = por %p121, %p122
      %p124 = scmp.ne.s32.totalorder %s115, %s116
      %p125 = scmp.eq.s32.totalorder %s16, 0
      %p126 = por %p124, %p125
      %p127 = scmp.ne.s32.totalorder %s115, %s116
      %p128 = scmp.eq.s32.totalorder %s17, 1
      %p129 = por %p127, %p128
      %p131 = scmp.ne.s32.totalorder %s116, %s130
      %p132 = scmp.eq.s32.totalorder %s17, 0
      %p133 = por %p131, %p132
      %p134 = scmp.le.s32.totalorder 1, %s11
      %p135 = scmp.lt.s32.totalorder %s11, 3
      %p136 = pnand %p134, %p135
      %p137 = pneg %p136
      // Predicated region
      $region9: #{metaoptnet_forward.1} parent=5 // pred_check
        _
      $region10: #{metaoptnet_forward.1} parent=5 // pred_check_branch
        %139 = sbr.rel (%p136) target = $region12
      $region11: #{metaoptnet_forward.1} parent=5 // pred_region
        %s140 = ssub.s32 %s11, 1
        // Predicated region
        $region13: #{metaoptnet_forward.1} parent=11 // pred_check
          %p141 = pneg %p84
        $region14: #{metaoptnet_forward.1} parent=11 // pred_check_branch
          %143 = sbr.rel (%p141) target = $region16
        $region15: #{metaoptnet_forward.1} parent=11 // pred_region
          _
        $region16: #{metaoptnet_forward.1} parent=11 // pred_fallthru
          _
      $region12: #{metaoptnet_forward.1} parent=5 // pred_fallthru
        _
      %p144 = scmp.lt.s32.totalorder %s11, 2
      // Predicated region
      $region17: #{metaoptnet_forward.1} parent=5 // pred_check
        %p145 = pneg %p144
      $region18: #{metaoptnet_forward.1} parent=5 // pred_check_branch
        %147 = sbr.rel (%p145) target = $region20
      $region19: #{metaoptnet_forward.1} parent=5 // pred_region
        // Predicated region
        $region21: #{metaoptnet_forward.1} parent=19 // pred_check
          %p148 = pneg %p31
        $region22: #{metaoptnet_forward.1} parent=19 // pred_check_branch
          %150 = sbr.rel (%p148) target = $region24
        $region23: #{metaoptnet_forward.1} parent=19 // pred_region
          %s151 = sand.u32 %s21, 1
          %s152 = sand.u32 %s21, 1
          %s153 = smul.addr %s152, 272
          %s154 = scalar_lea.vmem [#allocation3], %s153
          %s155 = smul.u32 4, %s11
          %s156 = smul.addr %s155, 4
          %s157 = scalar_lea.vmem %s0, %s156
          // Predicated region
          $region25: #{metaoptnet_forward.1} parent=23 // pred_check
            _
          $region26: #{metaoptnet_forward.1} parent=23 // pred_check_branch
            %159 = sbr.rel (0) target = $region28
          $region27: #{metaoptnet_forward.1} parent=23 // pred_region
            // Predicated region
            $region29: #{metaoptnet_forward.1} parent=27 // pred_check
              _
            $region30: #{metaoptnet_forward.1} parent=27 // pred_check_branch
              %161 = sbr.rel (0) target = $region32
            $region31: #{metaoptnet_forward.1} parent=27 // pred_region
              loop: start=0, step=1, limit=1
              $region33: #{metaoptnet_forward.1} parent=31 // loop_pre_header
                _
              $region34: #{metaoptnet_forward.1} parent=31 // loop_header
                %s163 = sphi 0, %s167
                %p164 = scmp.ge.s32.totalorder %s163, 1
                %s168 = sphi %s157, %s157
                %s169 = sphi %s154, %s154
              $region35: #{metaoptnet_forward.1} parent=31 // loop_header_branch
                %166 = sbr.rel (%p164) target = $region39
              $region36: #{metaoptnet_forward.1} parent=31 // loop_body
                %v170 = vld [vmem:[%s168] sm:$0xff]
                %171 = vst [vmem:[%s169] sm:$0xff] %v170
                %v172 = vld [vmem:[%s168 + $0x8] sm:$0xff]
                %173 = vst [vmem:[%s169 + $0x8] sm:$0xff] %v172
                %v174 = vld [vmem:[%s168 + $0x20] sm:$0xff]
                %175 = vst [vmem:[%s169 + $0x10] sm:$0xff] %v174
                %v176 = vld [vmem:[%s168 + $0x28] sm:$0xff]
                %177 = vst [vmem:[%s169 + $0x18] sm:$0xff] %v176
                %v178 = vld [vmem:[%s168 + $0x40] sm:$0xff]
                %179 = vst [vmem:[%s169 + $0x20] sm:$0xff] %v178
                %v180 = vld [vmem:[%s168 + $0x48] sm:$0xff]
                %181 = vst [vmem:[%s169 + $0x28] sm:$0xff] %v180
                %v182 = vld [vmem:[%s168 + $0x60] sm:$0xff]
                %183 = vst [vmem:[%s169 + $0x30] sm:$0xff] %v182
                %v184 = vld [vmem:[%s168 + $0x68] sm:$0xff]
                %185 = vst [vmem:[%s169 + $0x38] sm:$0xff] %v184
                %v186 = vld [vmem:[%s168 + $0x80] sm:$0xff]
                %187 = vst [vmem:[%s169 + $0x40] sm:$0xff] %v186
                %v188 = vld [vmem:[%s168 + $0x88] sm:$0xff]
                %189 = vst [vmem:[%s169 + $0x48] sm:$0xff] %v188
                %v190 = vld [vmem:[%s168 + $0xa0] sm:$0xff]
                %191 = vst [vmem:[%s169 + $0x50] sm:$0xff] %v190
                %v192 = vld [vmem:[%s168 + $0xa8] sm:$0xff]
                %193 = vst [vmem:[%s169 + $0x58] sm:$0xff] %v192
                %v194 = vld [vmem:[%s168 + $0xc0] sm:$0xff]
                %195 = vst [vmem:[%s169 + $0x60] sm:$0xff] %v194
                %v196 = vld [vmem:[%s168 + $0xc8] sm:$0xff]
                %197 = vst [vmem:[%s169 + $0x68] sm:$0xff] %v196
                %v198 = vld [vmem:[%s168 + $0xe0] sm:$0xff]
                %199 = vst [vmem:[%s169 + $0x70] sm:$0xff] %v198
                %v200 = vld [vmem:[%s168 + $0xe8] sm:$0xff]
                %201 = vst [vmem:[%s169 + $0x78] sm:$0xff] %v200
                %v202 = vld [vmem:[%s168 + $0x100] sm:$0xff]
                %203 = vst [vmem:[%s169 + $0x80] sm:$0xff] %v202
                %v204 = vld [vmem:[%s168 + $0x108] sm:$0xff]
                %205 = vst [vmem:[%s169 + $0x88] sm:$0xff] %v204
                %v206 = vld [vmem:[%s168 + $0x120] sm:$0xff]
                %207 = vst [vmem:[%s169 + $0x90] sm:$0xff] %v206
                %v208 = vld [vmem:[%s168 + $0x128] sm:$0xff]
                %209 = vst [vmem:[%s169 + $0x98] sm:$0xff] %v208
                %v210 = vld [vmem:[%s168 + $0x140] sm:$0xff]
                %211 = vst [vmem:[%s169 + $0xa0] sm:$0xff] %v210
                %v212 = vld [vmem:[%s168 + $0x148] sm:$0xff]
                %213 = vst [vmem:[%s169 + $0xa8] sm:$0xff] %v212
                %v214 = vld [vmem:[%s168 + $0x160] sm:$0xff]
                %215 = vst [vmem:[%s169 + $0xb0] sm:$0xff] %v214
                %v216 = vld [vmem:[%s168 + $0x168] sm:$0xff]
                %217 = vst [vmem:[%s169 + $0xb8] sm:$0xff] %v216
                %v218 = vld [vmem:[%s168 + $0x180] sm:$0xff]
                %219 = vst [vmem:[%s169 + $0xc0] sm:$0xff] %v218
                %v220 = vld [vmem:[%s168 + $0x188] sm:$0xff]
                %221 = vst [vmem:[%s169 + $0xc8] sm:$0xff] %v220
                %v222 = vld [vmem:[%s168 + $0x1a0] sm:$0xff]
                %223 = vst [vmem:[%s169 + $0xd0] sm:$0xff] %v222
                %v224 = vld [vmem:[%s168 + $0x1a8] sm:$0xff]
                %225 = vst [vmem:[%s169 + $0xd8] sm:$0xff] %v224
                %v226 = vld [vmem:[%s168 + $0x1c0] sm:$0xff]
                %227 = vst [vmem:[%s169 + $0xe0] sm:$0xff] %v226
                %v228 = vld [vmem:[%s168 + $0x1c8] sm:$0xff]
                %229 = vst [vmem:[%s169 + $0xe8] sm:$0xff] %v228
                %v230 = vld [vmem:[%s168 + $0x1e0] sm:$0xff]
                %231 = vst [vmem:[%s169 + $0xf0] sm:$0xff] %v230
                %v232 = vld [vmem:[%s168 + $0x1e8] sm:$0xff]
                %233 = vst [vmem:[%s169 + $0xf8] sm:$0xff] %v232
                %v234 = vld [vmem:[%s168 + $0x200] sm:$0xff]
                %235 = vst [vmem:[%s169 + $0x100] sm:$0xff] %v234
                %v236 = vld [vmem:[%s168 + $0x208] sm:$0xff]
                %237 = vst [vmem:[%s169 + $0x108] sm:$0xff] %v236
              $region37: #{metaoptnet_forward.1} parent=31 // loop_footer
                %s167 = sadd.s32 1, %s163
              $region38: #{metaoptnet_forward.1} parent=31 // loop_footer_branch
                %162 = sbr.rel target = $region34
              $region39: #{metaoptnet_forward.1} parent=31 // loop_exit
                _
            $region32: #{metaoptnet_forward.1} parent=27 // pred_fallthru
              _
            // Predicated region
            $region40: #{metaoptnet_forward.1} parent=27 // pred_check
              _
            $region41: #{metaoptnet_forward.1} parent=27 // pred_check_branch
              %239 = sbr.rel target = $region43
            $region42: #{metaoptnet_forward.1} parent=27 // pred_region
              _
            $region43: #{metaoptnet_forward.1} parent=27 // pred_fallthru
              _
          $region28: #{metaoptnet_forward.1} parent=23 // pred_fallthru
            _
          %240 = vnop
        $region24: #{metaoptnet_forward.1} parent=19 // pred_fallthru
          _
        // Predicated region
        $region44: #{metaoptnet_forward.1} parent=19 // pred_check
          %p241 = pneg %p57
        $region45: #{metaoptnet_forward.1} parent=19 // pred_check_branch
          %243 = sbr.rel (%p241) target = $region47
        $region46: #{metaoptnet_forward.1} parent=19 // pred_region
          %s244 = smul.u32 64, %s11
          %p245 = scmp.lt.s32.totalorder %s244, 127
          %s246 = scalar_select %p245, %s244, 127
          %s247 = smul.addr %s246, 4
          %s248 = scalar_lea.vmem %s1, %s247
          %s249 = smul.u32 64, %s11
        $region47: #{metaoptnet_forward.1} parent=19 // pred_fallthru
          _
      $region20: #{metaoptnet_forward.1} parent=5 // pred_fallthru
        _
      %p250 = scmp.le.s32.totalorder 1, %s11
      %p251 = scmp.lt.s32.totalorder %s11, 3
      %p252 = pnand %p250, %p251
      %p253 = pneg %p252
      // Predicated region
      $region48: #{metaoptnet_forward.1} parent=5 // pred_check
        _
      $region49: #{metaoptnet_forward.1} parent=5 // pred_check_branch
        %255 = sbr.rel (%p252) target = $region51
      $region50: #{metaoptnet_forward.1} parent=5 // pred_region
        %s256 = ssub.s32 %s11, 1
        %s257 = sand.u32 %s24, 1
        %s258 = sand.u32 %s24, 1
        %s259 = smul.addr %s258, 272
        %s260 = scalar_lea.vmem [#allocation3], %s259
        // Predicated region
        $region52: #{metaoptnet_forward.1} parent=50 // pred_check
          %p261 = pneg %p37
        $region53: #{metaoptnet_forward.1} parent=50 // pred_check_branch
          %263 = sbr.rel (%p261) target = $region55
        $region54: #{metaoptnet_forward.1} parent=50 // pred_region
          _
        $region55: #{metaoptnet_forward.1} parent=50 // pred_fallthru
          _
        %s264 = sand.u32 %s24, 1
        %s265 = sand.u32 %s24, 1
        %s266 = smul.addr %s265, 272
        %s267 = scalar_lea.vmem [#allocation3], %s266
        %p268 = pneg %p37
        %p269 = pneg %p34
        %s270 = smul.u32 64, %s16
        %p271 = scmp.lt.s32.totalorder %s270, 127
        %s272 = scalar_select %p271, %s270, 127
        %s273 = smul.addr %s272, 4
        %s274 = scalar_lea.vmem %s1, %s273
        %p275 = pneg %p63
        %p276 = pneg %p60
        %p277 = pneg %p84
        %p278 = pneg %p81
        %p279 = pneg %p105
        %p280 = pneg %p102
        %p281 = pneg %p126
        %p282 = pneg %p123
        %s283 = smul.u32 4, %s16
        %s284 = smul.u32 64, %s16
        %p285 = scmp.lt.s32.totalorder %s284, 127
        %s286 = scalar_select %p285, %s284, 127
        %s287 = smul.addr %s286, 4
        %s288 = scalar_lea.vmem %s1, %s287
        %s289 = smul.u32 64, %s16
        %p293 = scmp.eq.s32.totalorder %s16, 0
        // Predicated region
        $region56: #{metaoptnet_forward.1} parent=50 // pred_check
          %p294 = pneg %p293
        $region57: #{metaoptnet_forward.1} parent=50 // pred_check_branch
          %296 = sbr.rel (%p294) target = $region59
        $region58: #{metaoptnet_forward.1} parent=50 // pred_region
          %297 = vst [vmem:[#allocation2] sm:$0xff] 0.0
          %298 = vst [vmem:[#allocation2 + $0x8] sm:$0xff] 0.0
          %299 = vst [vmem:[#allocation2 + $0x10] sm:$0xff] 0.0
          %300 = vst [vmem:[#allocation2 + $0x18] sm:$0xff] 0.0
          %301 = vst [vmem:[#allocation2 + $0x20] sm:$0xff] 0.0
          %302 = vst [vmem:[#allocation2 + $0x28] sm:$0xff] 0.0
          %303 = vst [vmem:[#allocation2 + $0x30] sm:$0xff] 0.0
          %304 = vst [vmem:[#allocation2 + $0x38] sm:$0xff] 0.0
          %305 = vst [vmem:[#allocation2 + $0x40] sm:$0xff] 0.0
          %306 = vst [vmem:[#allocation2 + $0x48] sm:$0xff] 0.0
          %307 = vst [vmem:[#allocation2 + $0x50] sm:$0xff] 0.0
          %308 = vst [vmem:[#allocation2 + $0x58] sm:$0xff] 0.0
          %309 = vst [vmem:[#allocation2 + $0x60] sm:$0xff] 0.0
          %310 = vst [vmem:[#allocation2 + $0x68] sm:$0xff] 0.0
          %311 = vst [vmem:[#allocation2 + $0x70] sm:$0xff] 0.0
          %312 = vst [vmem:[#allocation2 + $0x78] sm:$0xff] 0.0
          %313 = vst [vmem:[#allocation2 + $0x80] sm:$0xff] 0.0
        $region59: #{metaoptnet_forward.1} parent=50 // pred_fallthru
          _
        %v314 = vld [vmem:[#allocation2] sm:$0xff]
        %v315 = vld [vmem:[#allocation2 + $0x8] sm:$0xff]
        %v316 = vld [vmem:[#allocation2 + $0x10] sm:$0xff]
        %v317 = vld [vmem:[#allocation2 + $0x18] sm:$0xff]
        %v318 = vld [vmem:[#allocation2 + $0x20] sm:$0xff]
        %v319 = vld [vmem:[#allocation2 + $0x28] sm:$0xff]
        %v320 = vld [vmem:[#allocation2 + $0x30] sm:$0xff]
        %v321 = vld [vmem:[#allocation2 + $0x38] sm:$0xff]
        %v322 = vld [vmem:[#allocation2 + $0x40] sm:$0xff]
        %v323 = vld [vmem:[#allocation2 + $0x48] sm:$0xff]
        %v324 = vld [vmem:[#allocation2 + $0x50] sm:$0xff]
        %v325 = vld [vmem:[#allocation2 + $0x58] sm:$0xff]
        %v326 = vld [vmem:[#allocation2 + $0x60] sm:$0xff]
        %v327 = vld [vmem:[#allocation2 + $0x68] sm:$0xff]
        %v328 = vld [vmem:[#allocation2 + $0x70] sm:$0xff]
        %v329 = vld [vmem:[#allocation2 + $0x78] sm:$0xff]
        %v330 = vld [vmem:[#allocation2 + $0x80] sm:$0xff]
        %v331 = vld [vmem:[%s260] sm:$0xff]
        %v332 = vld [vmem:[%s260 + $0x8] sm:$0xff]
        %v333 = vld [vmem:[%s260 + $0x10] sm:$0xff]
        %v334 = vld [vmem:[%s260 + $0x18] sm:$0xff]
        %v335 = vld [vmem:[%s260 + $0x20] sm:$0xff]
        %v336 = vld [vmem:[%s260 + $0x28] sm:$0xff]
        %v337 = vld [vmem:[%s260 + $0x30] sm:$0xff]
        %v338 = vld [vmem:[%s260 + $0x38] sm:$0xff]
        %v339 = vld [vmem:[%s260 + $0x40] sm:$0xff]
        %v340 = vld [vmem:[%s260 + $0x48] sm:$0xff]
        %v341 = vld [vmem:[%s260 + $0x50] sm:$0xff]
        %v342 = vld [vmem:[%s260 + $0x58] sm:$0xff]
        %v343 = vld [vmem:[%s260 + $0x60] sm:$0xff]
        %v344 = vld [vmem:[%s260 + $0x68] sm:$0xff]
        %v345 = vld [vmem:[%s260 + $0x70] sm:$0xff]
        %v346 = vld [vmem:[%s260 + $0x78] sm:$0xff]
        %v347 = vld [vmem:[%s260 + $0x80] sm:$0xff]
        %v348 = vld [vmem:[%s260 + $0x88] sm:$0xff]
        %v349 = vld [vmem:[%s260 + $0x90] sm:$0xff]
        %v350 = vld [vmem:[%s260 + $0x98] sm:$0xff]
        %v351 = vld [vmem:[%s260 + $0xa0] sm:$0xff]
        %v352 = vld [vmem:[%s260 + $0xa8] sm:$0xff]
        %v353 = vld [vmem:[%s260 + $0xb0] sm:$0xff]
        %v354 = vld [vmem:[%s260 + $0xb8] sm:$0xff]
        %v355 = vld [vmem:[%s260 + $0xc0] sm:$0xff]
        %v356 = vld [vmem:[%s260 + $0xc8] sm:$0xff]
        %v357 = vld [vmem:[%s260 + $0xd0] sm:$0xff]
        %v358 = vld [vmem:[%s260 + $0xd8] sm:$0xff]
        %v359 = vld [vmem:[%s260 + $0xe0] sm:$0xff]
        %v360 = vld [vmem:[%s260 + $0xe8] sm:$0xff]
        %v361 = vld [vmem:[%s260 + $0xf0] sm:$0xff]
        %v362 = vld [vmem:[%s260 + $0xf8] sm:$0xff]
        %v363 = vld [vmem:[%s260 + $0x100] sm:$0xff]
        %v364 = vld [vmem:[%s260 + $0x108] sm:$0xff]
        %v365 = vld [vmem:[%s288] sm:$0xf]
        %v366 = vld [vmem:[%s288 + $0x4] sm:$0xf]
        %v367 = vld [vmem:[%s288 + $0x8] sm:$0xf]
        %v368 = vld [vmem:[%s288 + $0xc] sm:$0xf]
        %v369 = vld [vmem:[%s288 + $0x10] sm:$0xf]
        %v370 = vld [vmem:[%s288 + $0x14] sm:$0xf]
        %v371 = vld [vmem:[%s288 + $0x18] sm:$0xf]
        %v372 = vld [vmem:[%s288 + $0x1c] sm:$0xf]
        %v373 = vld [vmem:[%s288 + $0x20] sm:$0xf]
        %v374 = vld [vmem:[%s288 + $0x24] sm:$0xf]
        %v375 = vld [vmem:[%s288 + $0x28] sm:$0xf]
        %v376 = vld [vmem:[%s288 + $0x2c] sm:$0xf]
        %v377 = vld [vmem:[%s288 + $0x30] sm:$0xf]
        %v378 = vld [vmem:[%s288 + $0x34] sm:$0xf]
        %v379 = vld [vmem:[%s288 + $0x38] sm:$0xf]
        %v380 = vld [vmem:[%s288 + $0x3c] sm:$0xf]
        %v381 = vld [vmem:[%s288 + $0x40] sm:$0xf]
        %v382 = vld [vmem:[%s288 + $0x44] sm:$0xf]
        %v383 = vld [vmem:[%s288 + $0x48] sm:$0xf]
        %v384 = vld [vmem:[%s288 + $0x4c] sm:$0xf]
        %v385 = vld [vmem:[%s288 + $0x50] sm:$0xf]
        %v386 = vld [vmem:[%s288 + $0x54] sm:$0xf]
        %v387 = vld [vmem:[%s288 + $0x58] sm:$0xf]
        %v388 = vld [vmem:[%s288 + $0x5c] sm:$0xf]
        %v389 = vld [vmem:[%s288 + $0x60] sm:$0xf]
        %v390 = vld [vmem:[%s288 + $0x64] sm:$0xf]
        %v391 = vld [vmem:[%s288 + $0x68] sm:$0xf]
        %v392 = vld [vmem:[%s288 + $0x6c] sm:$0xf]
        %v393 = vld [vmem:[%s288 + $0x70] sm:$0xf]
        %v394 = vld [vmem:[%s288 + $0x74] sm:$0xf]
        %v395 = vld [vmem:[%s288 + $0x78] sm:$0xf]
        %v396 = vld [vmem:[%s288 + $0x7c] sm:$0xf]
        %v397 = vld [vmem:[%s288 + $0x80] sm:$0xf]
        %v398 = vld [vmem:[%s288 + $0x84] sm:$0xf]
        %v399 = vld [vmem:[%s288 + $0x88] sm:$0xf]
        %v400 = vld [vmem:[%s288 + $0x8c] sm:$0xf]
        %v401 = vld [vmem:[%s288 + $0x90] sm:$0xf]
        %v402 = vld [vmem:[%s288 + $0x94] sm:$0xf]
        %v403 = vld [vmem:[%s288 + $0x98] sm:$0xf]
        %v404 = vld [vmem:[%s288 + $0x9c] sm:$0xf]
        %v405 = vld [vmem:[%s288 + $0xa0] sm:$0xf]
        %v406 = vld [vmem:[%s288 + $0xa4] sm:$0xf]
        %v407 = vld [vmem:[%s288 + $0xa8] sm:$0xf]
        %v408 = vld [vmem:[%s288 + $0xac] sm:$0xf]
        %v409 = vld [vmem:[%s288 + $0xb0] sm:$0xf]
        %v410 = vld [vmem:[%s288 + $0xb4] sm:$0xf]
        %v411 = vld [vmem:[%s288 + $0xb8] sm:$0xf]
        %v412 = vld [vmem:[%s288 + $0xbc] sm:$0xf]
        %v413 = vld [vmem:[%s288 + $0xc0] sm:$0xf]
        %v414 = vld [vmem:[%s288 + $0xc4] sm:$0xf]
        %v415 = vld [vmem:[%s288 + $0xc8] sm:$0xf]
        %v416 = vld [vmem:[%s288 + $0xcc] sm:$0xf]
        %v417 = vld [vmem:[%s288 + $0xd0] sm:$0xf]
        %v418 = vld [vmem:[%s288 + $0xd4] sm:$0xf]
        %v419 = vld [vmem:[%s288 + $0xd8] sm:$0xf]
        %v420 = vld [vmem:[%s288 + $0xdc] sm:$0xf]
        %v421 = vld [vmem:[%s288 + $0xe0] sm:$0xf]
        %v422 = vld [vmem:[%s288 + $0xe4] sm:$0xf]
        %v423 = vld [vmem:[%s288 + $0xe8] sm:$0xf]
        %v424 = vld [vmem:[%s288 + $0xec] sm:$0xf]
        %v425 = vld [vmem:[%s288 + $0xf0] sm:$0xf]
        %v426 = vld [vmem:[%s288 + $0xf4] sm:$0xf]
        %v427 = vld [vmem:[%s288 + $0xf8] sm:$0xf]
        %v428 = vld [vmem:[%s288 + $0xfc] sm:$0xf]
        %v463 = vunpack.c.l.b16 %v331
        %v464 = vunpack.c.h.b16 %v331
        %v465 = vunpack.c.l.b16 %v332
        %v466 = vunpack.c.h.b16 %v332
        %v467 = vunpack.c.l.b16 %v333
        %v468 = vunpack.c.h.b16 %v333
        %v469 = vunpack.c.l.b16 %v334
        %v470 = vunpack.c.h.b16 %v334
        %v471 = vunpack.c.l.b16 %v335
        %v472 = vunpack.c.h.b16 %v335
        %v473 = vunpack.c.l.b16 %v336
        %v474 = vunpack.c.h.b16 %v336
        %v475 = vunpack.c.l.b16 %v337
        %v476 = vunpack.c.h.b16 %v337
        %v477 = vunpack.c.l.b16 %v338
        %v478 = vunpack.c.h.b16 %v338
        %v479 = vunpack.c.l.b16 %v339
        %v480 = vunpack.c.h.b16 %v339
        %v481 = vunpack.c.l.b16 %v340
        %v482 = vunpack.c.h.b16 %v340
        %v483 = vunpack.c.l.b16 %v341
        %v484 = vunpack.c.h.b16 %v341
        %v485 = vunpack.c.l.b16 %v342
        %v486 = vunpack.c.h.b16 %v342
        %v487 = vunpack.c.l.b16 %v343
        %v488 = vunpack.c.h.b16 %v343
        %v489 = vunpack.c.l.b16 %v344
        %v490 = vunpack.c.h.b16 %v344
        %v491 = vunpack.c.l.b16 %v345
        %v492 = vunpack.c.h.b16 %v345
        %v493 = vunpack.c.l.b16 %v346
        %v494 = vunpack.c.h.b16 %v346
        %v495 = vunpack.c.l.b16 %v347
        %v496 = vunpack.c.h.b16 %v347
        %v497 = vunpack.c.l.b16 %v348
        %v498 = vunpack.c.h.b16 %v348
        %v499 = vunpack.c.l.b16 %v349
        %v500 = vunpack.c.h.b16 %v349
        %v501 = vunpack.c.l.b16 %v350
        %v502 = vunpack.c.h.b16 %v350
        %v503 = vunpack.c.l.b16 %v351
        %v504 = vunpack.c.h.b16 %v351
        %v505 = vunpack.c.l.b16 %v352
        %v506 = vunpack.c.h.b16 %v352
        %v507 = vunpack.c.l.b16 %v353
        %v508 = vunpack.c.h.b16 %v353
        %v509 = vunpack.c.l.b16 %v354
        %v510 = vunpack.c.h.b16 %v354
        %v511 = vunpack.c.l.b16 %v355
        %v512 = vunpack.c.h.b16 %v355
        %v513 = vunpack.c.l.b16 %v356
        %v514 = vunpack.c.h.b16 %v356
        %v515 = vunpack.c.l.b16 %v357
        %v516 = vunpack.c.h.b16 %v357
        %v517 = vunpack.c.l.b16 %v358
        %v518 = vunpack.c.h.b16 %v358
        %v519 = vunpack.c.l.b16 %v359
        %v520 = vunpack.c.h.b16 %v359
        %v521 = vunpack.c.l.b16 %v360
        %v522 = vunpack.c.h.b16 %v360
        %v523 = vunpack.c.l.b16 %v361
        %v524 = vunpack.c.h.b16 %v361
        %v525 = vunpack.c.l.b16 %v362
        %v526 = vunpack.c.h.b16 %v362
        %v527 = vunpack.c.l.b16 %v363
        %v528 = vunpack.c.h.b16 %v363
        %v529 = vunpack.c.l.b16 %v364
        %v530 = vunpack.c.h.b16 %v364
        %v531 = vpack.c.b16 %v467, %v463
        %v532 = vpack.c.b16 %v468, %v464
        %v533 = vpack.c.b16 %v469, %v465
        %v534 = vpack.c.b16 %v470, %v466
        %v535 = vpack.c.b16 %v475, %v471
        %v536 = vpack.c.b16 %v476, %v472
        %v537 = vpack.c.b16 %v477, %v473
        %v538 = vpack.c.b16 %v478, %v474
        %v539 = vpack.c.b16 %v483, %v479
        %v540 = vpack.c.b16 %v484, %v480
        %v541 = vpack.c.b16 %v485, %v481
        %v542 = vpack.c.b16 %v486, %v482
        %v543 = vpack.c.b16 %v491, %v487
        %v544 = vpack.c.b16 %v492, %v488
        %v545 = vpack.c.b16 %v493, %v489
        %v546 = vpack.c.b16 %v494, %v490
        %v547 = vpack.c.b16 %v499, %v495
        %v548 = vpack.c.b16 %v500, %v496
        %v549 = vpack.c.b16 %v501, %v497
        %v550 = vpack.c.b16 %v502, %v498
        %v551 = vpack.c.b16 %v507, %v503
        %v552 = vpack.c.b16 %v508, %v504
        %v553 = vpack.c.b16 %v509, %v505
        %v554 = vpack.c.b16 %v510, %v506
        %v555 = vpack.c.b16 %v515, %v511
        %v556 = vpack.c.b16 %v516, %v512
        %v557 = vpack.c.b16 %v517, %v513
        %v558 = vpack.c.b16 %v518, %v514
        %v559 = vpack.c.b16 %v523, %v519
        %v560 = vpack.c.b16 %v524, %v520
        %v561 = vpack.c.b16 %v525, %v521
        %v562 = vpack.c.b16 %v526, %v522
        %v563 = vpack.c.b16 %v527, %v527
        %v564 = vpack.c.b16 %v528, %v528
        %v565 = vpack.c.b16 %v529, %v529
        %v566 = vpack.c.b16 %v530, %v530
        %v667 = vunpack.c.l.b16 %v365
        %v668 = vunpack.c.l.b16 %v366
        %v669 = vunpack.c.l.b16 %v367
        %v670 = vunpack.c.l.b16 %v368
        %v671 = vunpack.c.l.b16 %v369
        %v672 = vunpack.c.l.b16 %v370
        %v673 = vunpack.c.l.b16 %v371
        %v674 = vunpack.c.l.b16 %v372
        %v675 = vunpack.c.l.b16 %v373
        %v676 = vunpack.c.l.b16 %v374
        %v677 = vunpack.c.l.b16 %v375
        %v678 = vunpack.c.l.b16 %v376
        %v679 = vunpack.c.l.b16 %v377
        %v680 = vunpack.c.l.b16 %v378
        %v681 = vunpack.c.l.b16 %v379
        %v682 = vunpack.c.l.b16 %v380
        %v683 = vunpack.c.l.b16 %v381
        %v684 = vunpack.c.l.b16 %v382
        %v685 = vunpack.c.l.b16 %v383
        %v686 = vunpack.c.l.b16 %v384
        %v687 = vunpack.c.l.b16 %v385
        %v688 = vunpack.c.l.b16 %v386
        %v689 = vunpack.c.l.b16 %v387
        %v690 = vunpack.c.l.b16 %v388
        %v691 = vunpack.c.l.b16 %v389
        %v692 = vunpack.c.l.b16 %v390
        %v693 = vunpack.c.l.b16 %v391
        %v694 = vunpack.c.l.b16 %v392
        %v695 = vunpack.c.l.b16 %v393
        %v696 = vunpack.c.l.b16 %v394
        %v697 = vunpack.c.l.b16 %v395
        %v698 = vunpack.c.l.b16 %v396
        %v699 = vunpack.c.l.b16 %v397
        %v700 = vunpack.c.l.b16 %v398
        %v701 = vunpack.c.l.b16 %v399
        %v702 = vunpack.c.l.b16 %v400
        %v703 = vunpack.c.l.b16 %v401
        %v704 = vunpack.c.l.b16 %v402
        %v705 = vunpack.c.l.b16 %v403
        %v706 = vunpack.c.l.b16 %v404
        %v707 = vunpack.c.l.b16 %v405
        %v708 = vunpack.c.l.b16 %v406
        %v709 = vunpack.c.l.b16 %v407
        %v710 = vunpack.c.l.b16 %v408
        %v711 = vunpack.c.l.b16 %v409
        %v712 = vunpack.c.l.b16 %v410
        %v713 = vunpack.c.l.b16 %v411
        %v714 = vunpack.c.l.b16 %v412
        %v715 = vunpack.c.l.b16 %v413
        %v716 = vunpack.c.l.b16 %v414
        %v717 = vunpack.c.l.b16 %v415
        %v718 = vunpack.c.l.b16 %v416
        %v719 = vunpack.c.l.b16 %v417
        %v720 = vunpack.c.l.b16 %v418
        %v721 = vunpack.c.l.b16 %v419
        %v722 = vunpack.c.l.b16 %v420
        %v723 = vunpack.c.l.b16 %v421
        %v724 = vunpack.c.l.b16 %v422
        %v725 = vunpack.c.l.b16 %v423
        %v726 = vunpack.c.l.b16 %v424
        %v727 = vunpack.c.l.b16 %v425
        %v728 = vunpack.c.l.b16 %v426
        %v729 = vunpack.c.l.b16 %v427
        %v730 = vunpack.c.l.b16 %v428
        %v731 = vpack.c.b16 %v668, %v667
        %v732 = vpack.c.b16 %v670, %v669
        %v733 = vpack.c.b16 %v672, %v671
        %v734 = vpack.c.b16 %v674, %v673
        %v735 = vpack.c.b16 %v676, %v675
        %v736 = vpack.c.b16 %v678, %v677
        %v737 = vpack.c.b16 %v680, %v679
        %v738 = vpack.c.b16 %v682, %v681
        %v739 = vpack.c.b16 %v684, %v683
        %v740 = vpack.c.b16 %v686, %v685
        %v741 = vpack.c.b16 %v688, %v687
        %v742 = vpack.c.b16 %v690, %v689
        %v743 = vpack.c.b16 %v692, %v691
        %v744 = vpack.c.b16 %v694, %v693
        %v745 = vpack.c.b16 %v696, %v695
        %v746 = vpack.c.b16 %v698, %v697
        %v747 = vpack.c.b16 %v700, %v699
        %v748 = vpack.c.b16 %v702, %v701
        %v749 = vpack.c.b16 %v704, %v703
        %v750 = vpack.c.b16 %v706, %v705
        %v751 = vpack.c.b16 %v708, %v707
        %v752 = vpack.c.b16 %v710, %v709
        %v753 = vpack.c.b16 %v712, %v711
        %v754 = vpack.c.b16 %v714, %v713
        %v755 = vpack.c.b16 %v716, %v715
        %v756 = vpack.c.b16 %v718, %v717
        %v757 = vpack.c.b16 %v720, %v719
        %v758 = vpack.c.b16 %v722, %v721
        %v759 = vpack.c.b16 %v724, %v723
        %v760 = vpack.c.b16 %v726, %v725
        %v761 = vpack.c.b16 %v728, %v727
        %v762 = vpack.c.b16 %v730, %v729
        %795 = vmatprep.subr.bf16.mxu0 0
        %796 = vmatpush1.bf16.msra.mxu0 %v731
        %797 = vmatprep.subr.bf16.mxu0 0
        %798 = vmatpush1.bf16.msra.mxu0 %v732
        %799 = vmatprep.subr.bf16.mxu0 0
        %800 = vmatpush1.bf16.msra.mxu0 %v733
        %801 = vmatprep.subr.bf16.mxu0 0
        %802 = vmatpush1.bf16.msra.mxu0 %v734
        %803 = vmatprep.subr.bf16.mxu0 0
        %804 = vmatpush1.bf16.msra.mxu0 %v735
        %805 = vmatprep.subr.bf16.mxu0 0
        %806 = vmatpush1.bf16.msra.mxu0 %v736
        %807 = vmatprep.subr.bf16.mxu0 0
        %808 = vmatpush1.bf16.msra.mxu0 %v737
        %809 = vmatprep.subr.bf16.mxu0 0
        %810 = vmatpush1.bf16.msra.mxu0 %v738
        %811 = vmatprep.subr.bf16.mxu0 0
        %812 = vmatpush1.bf16.msra.mxu0 %v739
        %813 = vmatprep.subr.bf16.mxu0 0
        %814 = vmatpush1.bf16.msra.mxu0 %v740
        %815 = vmatprep.subr.bf16.mxu0 0
        %816 = vmatpush1.bf16.msra.mxu0 %v741
        %817 = vmatprep.subr.bf16.mxu0 0
        %818 = vmatpush1.bf16.msra.mxu0 %v742
        %819 = vmatprep.subr.bf16.mxu0 0
        %820 = vmatpush1.bf16.msra.mxu0 %v743
        %821 = vmatprep.subr.bf16.mxu0 0
        %822 = vmatpush1.bf16.msra.mxu0 %v744
        %823 = vmatprep.subr.bf16.mxu0 0
        %824 = vmatpush1.bf16.msra.mxu0 %v745
        %825 = vmatprep.subr.bf16.mxu0 0
        %826 = vmatpush1.bf16.msra.mxu0 %v746
        %827 = vmatprep.mubr.bf16.mxu0 %v532
        %828 = vmatmul.mubr.bf16.gmra.mrb[0].mxu0 %v531
        %v829 = vpop.f32.mrb[0].mxu0
        %v830 = vadd.f32 0.0, %v829
        %v831 = vpop.f32.mrb[0].mxu0
        %v832 = vpop.f32.mrb[0].mxu0
        %v833 = vadd.f32 0.0, %v832
        %v834 = vpop.f32.mrb[0].mxu0
        %835 = vmatprep.mubr.bf16.mxu0 %v536
        %836 = vmatmul.mubr.bf16.gmra.mrb[0].mxu0 %v535
        %v837 = vpop.f32.mrb[0].mxu0
        %v838 = vadd.f32 0.0, %v837
        %v839 = vpop.f32.mrb[0].mxu0
        %v840 = vpop.f32.mrb[0].mxu0
        %v841 = vadd.f32 0.0, %v840
        %v842 = vpop.f32.mrb[0].mxu0
        %843 = vmatprep.mubr.bf16.mxu0 %v540
        %844 = vmatmul.mubr.bf16.gmra.mrb[0].mxu0 %v539
        %v845 = vpop.f32.mrb[0].mxu0
        %v846 = vadd.f32 0.0, %v845
        %v847 = vpop.f32.mrb[0].mxu0
        %v848 = vpop.f32.mrb[0].mxu0
        %v849 = vadd.f32 0.0, %v848
        %v850 = vpop.f32.mrb[0].mxu0
        %851 = vmatprep.mubr.bf16.mxu0 %v544
        %852 = vmatmul.mubr.bf16.gmra.mrb[0].mxu0 %v543
        %v853 = vpop.f32.mrb[0].mxu0
        %v854 = vadd.f32 0.0, %v853
        %v855 = vpop.f32.mrb[0].mxu0
        %v856 = vpop.f32.mrb[0].mxu0
        %v857 = vadd.f32 0.0, %v856
        %v858 = vpop.f32.mrb[0].mxu0
        %859 = vmatprep.mubr.bf16.mxu0 %v548
        %860 = vmatmul.mubr.bf16.gmra.mrb[0].mxu0 %v547
        %v861 = vpop.f32.mrb[0].mxu0
        %v862 = vadd.f32 0.0, %v861
        %v863 = vpop.f32.mrb[0].mxu0
        %v864 = vpop.f32.mrb[0].mxu0
        %v865 = vadd.f32 0.0, %v864
        %v866 = vpop.f32.mrb[0].mxu0
        %867 = vmatprep.mubr.bf16.mxu0 %v552
        %868 = vmatmul.mubr.bf16.gmra.mrb[0].mxu0 %v551
        %v869 = vpop.f32.mrb[0].mxu0
        %v870 = vadd.f32 0.0, %v869
        %v871 = vpop.f32.mrb[0].mxu0
        %v872 = vpop.f32.mrb[0].mxu0
        %v873 = vadd.f32 0.0, %v872
        %v874 = vpop.f32.mrb[0].mxu0
        %875 = vmatprep.mubr.bf16.mxu0 %v556
        %876 = vmatmul.mubr.bf16.gmra.mrb[0].mxu0 %v555
        %v877 = vpop.f32.mrb[0].mxu0
        %v878 = vadd.f32 0.0, %v877
        %v879 = vpop.f32.mrb[0].mxu0
        %v880 = vpop.f32.mrb[0].mxu0
        %v881 = vadd.f32 0.0, %v880
        %v882 = vpop.f32.mrb[0].mxu0
        %883 = vmatprep.mubr.bf16.mxu0 %v560
        %884 = vmatmul.mubr.bf16.gmra.mrb[0].mxu0 %v559
        %v885 = vpop.f32.mrb[0].mxu0
        %v886 = vadd.f32 0.0, %v885
        %v887 = vpop.f32.mrb[0].mxu0
        %v888 = vpop.f32.mrb[0].mxu0
        %v889 = vadd.f32 0.0, %v888
        %v890 = vpop.f32.mrb[0].mxu0
        %891 = vmatprep.mubr.bf16.mxu0 %v564
        %892 = vmatmul.mubr.bf16.gmra.mrb[0].mxu0 %v563
        %v893 = vpop.f32.mrb[0].mxu0
        %v894 = vadd.f32 0.0, %v893
        %v895 = vpop.f32.mrb[0].mxu0
        %v896 = vpop.f32.mrb[0].mxu0
        %v897 = vpop.f32.mrb[0].mxu0
        %898 = vdwg.mxu0
        %899 = vmatprep.subr.bf16.mxu0 0
        %900 = vmatpush1.bf16.msra.mxu0 %v747
        %901 = vmatprep.subr.bf16.mxu0 0
        %902 = vmatpush1.bf16.msra.mxu0 %v748
        %903 = vmatprep.subr.bf16.mxu0 0
        %904 = vmatpush1.bf16.msra.mxu0 %v749
        %905 = vmatprep.subr.bf16.mxu0 0
        %906 = vmatpush1.bf16.msra.mxu0 %v750
        %907 = vmatprep.subr.bf16.mxu0 0
        %908 = vmatpush1.bf16.msra.mxu0 %v751
        %909 = vmatprep.subr.bf16.mxu0 0
        %910 = vmatpush1.bf16.msra.mxu0 %v752
        %911 = vmatprep.subr.bf16.mxu0 0
        %912 = vmatpush1.bf16.msra.mxu0 %v753
        %913 = vmatprep.subr.bf16.mxu0 0
        %914 = vmatpush1.bf16.msra.mxu0 %v754
        %915 = vmatprep.subr.bf16.mxu0 0
        %916 = vmatpush1.bf16.msra.mxu0 %v755
        %917 = vmatprep.subr.bf16.mxu0 0
        %918 = vmatpush1.bf16.msra.mxu0 %v756
        %919 = vmatprep.subr.bf16.mxu0 0
        %920 = vmatpush1.bf16.msra.mxu0 %v757
        %921 = vmatprep.subr.bf16.mxu0 0
        %922 = vmatpush1.bf16.msra.mxu0 %v758
        %923 = vmatprep.subr.bf16.mxu0 0
        %924 = vmatpush1.bf16.msra.mxu0 %v759
        %925 = vmatprep.subr.bf16.mxu0 0
        %926 = vmatpush1.bf16.msra.mxu0 %v760
        %927 = vmatprep.subr.bf16.mxu0 0
        %928 = vmatpush1.bf16.msra.mxu0 %v761
        %929 = vmatprep.subr.bf16.mxu0 0
        %930 = vmatpush1.bf16.msra.mxu0 %v762
        %931 = vmatprep.mubr.bf16.mxu0 %v534
        %932 = vmatmul.mubr.bf16.gmra.mrb[0].mxu0 %v533
        %v933 = vpop.f32.mrb[0].mxu0
        %v934 = vadd.f32 %v830, %v933
        %v935 = vpop.f32.mrb[0].mxu0
        %v936 = vpop.f32.mrb[0].mxu0
        %v937 = vadd.f32 %v833, %v936
        %v938 = vpop.f32.mrb[0].mxu0
        %939 = vmatprep.mubr.bf16.mxu0 %v538
        %940 = vmatmul.mubr.bf16.gmra.mrb[0].mxu0 %v537
        %v941 = vpop.f32.mrb[0].mxu0
        %v942 = vadd.f32 %v838, %v941
        %v943 = vpop.f32.mrb[0].mxu0
        %v944 = vpop.f32.mrb[0].mxu0
        %v945 = vadd.f32 %v841, %v944
        %v946 = vpop.f32.mrb[0].mxu0
        %947 = vmatprep.mubr.bf16.mxu0 %v542
        %948 = vmatmul.mubr.bf16.gmra.mrb[0].mxu0 %v541
        %v949 = vpop.f32.mrb[0].mxu0
        %v950 = vadd.f32 %v846, %v949
        %v951 = vpop.f32.mrb[0].mxu0
        %v952 = vpop.f32.mrb[0].mxu0
        %v953 = vadd.f32 %v849, %v952
        %v954 = vpop.f32.mrb[0].mxu0
        %955 = vmatprep.mubr.bf16.mxu0 %v546
        %956 = vmatmul.mubr.bf16.gmra.mrb[0].mxu0 %v545
        %v957 = vpop.f32.mrb[0].mxu0
        %v958 = vadd.f32 %v854, %v957
        %v959 = vpop.f32.mrb[0].mxu0
        %v960 = vpop.f32.mrb[0].mxu0
        %v961 = vadd.f32 %v857, %v960
        %v962 = vpop.f32.mrb[0].mxu0
        %963 = vmatprep.mubr.bf16.mxu0 %v550
        %964 = vmatmul.mubr.bf16.gmra.mrb[0].mxu0 %v549
        %v965 = vpop.f32.mrb[0].mxu0
        %v966 = vadd.f32 %v862, %v965
        %v967 = vpop.f32.mrb[0].mxu0
        %v968 = vpop.f32.mrb[0].mxu0
        %v969 = vadd.f32 %v865, %v968
        %v970 = vpop.f32.mrb[0].mxu0
        %971 = vmatprep.mubr.bf16.mxu0 %v554
        %972 = vmatmul.mubr.bf16.gmra.mrb[0].mxu0 %v553
        %v973 = vpop.f32.mrb[0].mxu0
        %v974 = vadd.f32 %v870, %v973
        %v975 = vpop.f32.mrb[0].mxu0
        %v976 = vpop.f32.mrb[0].mxu0
        %v977 = vadd.f32 %v873, %v976
        %v978 = vpop.f32.mrb[0].mxu0
        %979 = vmatprep.mubr.bf16.mxu0 %v558
        %980 = vmatmul.mubr.bf16.gmra.mrb[0].mxu0 %v557
        %v981 = vpop.f32.mrb[0].mxu0
        %v982 = vadd.f32 %v878, %v981
        %v983 = vpop.f32.mrb[0].mxu0
        %v984 = vpop.f32.mrb[0].mxu0
        %v985 = vadd.f32 %v881, %v984
        %v986 = vpop.f32.mrb[0].mxu0
        %987 = vmatprep.mubr.bf16.mxu0 %v562
        %988 = vmatmul.mubr.bf16.gmra.mrb[0].mxu0 %v561
        %v989 = vpop.f32.mrb[0].mxu0
        %v990 = vadd.f32 %v886, %v989
        %v991 = vpop.f32.mrb[0].mxu0
        %v992 = vpop.f32.mrb[0].mxu0
        %v993 = vadd.f32 %v889, %v992
        %v994 = vpop.f32.mrb[0].mxu0
        %995 = vmatprep.mubr.bf16.mxu0 %v566
        %996 = vmatmul.mubr.bf16.gmra.mrb[0].mxu0 %v565
        %v997 = vpop.f32.mrb[0].mxu0
        %v998 = vadd.f32 %v894, %v997
        %v999 = vpop.f32.mrb[0].mxu0
        %v1000 = vpop.f32.mrb[0].mxu0
        %v1001 = vpop.f32.mrb[0].mxu0
        %1002 = vdwg.mxu0
        %v1003 = vadd.f32 %v314, %v934
        %v1004 = vadd.f32 %v315, %v937
        %v1005 = vadd.f32 %v316, %v942
        %v1006 = vadd.f32 %v317, %v945
        %v1007 = vadd.f32 %v318, %v950
        %v1008 = vadd.f32 %v319, %v953
        %v1009 = vadd.f32 %v320, %v958
        %v1010 = vadd.f32 %v321, %v961
        %v1011 = vadd.f32 %v322, %v966
        %v1012 = vadd.f32 %v323, %v969
        %v1013 = vadd.f32 %v324, %v974
        %v1014 = vadd.f32 %v325, %v977
        %v1015 = vadd.f32 %v326, %v982
        %v1016 = vadd.f32 %v327, %v985
        %v1017 = vadd.f32 %v328, %v990
        %v1018 = vadd.f32 %v329, %v993
        %v1019 = vadd.f32 %v330, %v998
        %1020 = vst [vmem:[#allocation2] sm:$0xff] %v1003
        %1021 = vst [vmem:[#allocation2 + $0x8] sm:$0xff] %v1004
        %1022 = vst [vmem:[#allocation2 + $0x10] sm:$0xff] %v1005
        %1023 = vst [vmem:[#allocation2 + $0x18] sm:$0xff] %v1006
        %1024 = vst [vmem:[#allocation2 + $0x20] sm:$0xff] %v1007
        %1025 = vst [vmem:[#allocation2 + $0x28] sm:$0xff] %v1008
        %1026 = vst [vmem:[#allocation2 + $0x30] sm:$0xff] %v1009
        %1027 = vst [vmem:[#allocation2 + $0x38] sm:$0xff] %v1010
        %1028 = vst [vmem:[#allocation2 + $0x40] sm:$0xff] %v1011
        %1029 = vst [vmem:[#allocation2 + $0x48] sm:$0xff] %v1012
        %1030 = vst [vmem:[#allocation2 + $0x50] sm:$0xff] %v1013
        %1031 = vst [vmem:[#allocation2 + $0x58] sm:$0xff] %v1014
        %1032 = vst [vmem:[#allocation2 + $0x60] sm:$0xff] %v1015
        %1033 = vst [vmem:[#allocation2 + $0x68] sm:$0xff] %v1016
        %1034 = vst [vmem:[#allocation2 + $0x70] sm:$0xff] %v1017
        %1035 = vst [vmem:[#allocation2 + $0x78] sm:$0xff] %v1018
        %1036 = vst [vmem:[#allocation2 + $0x80] sm:$0xff] %v1019
        %p1037 = scmp.eq.s32.totalorder %s16, 1
        // Predicated region
        $region60: #{metaoptnet_forward.1} parent=50 // pred_check
          %p1038 = pneg %p1037
        $region61: #{metaoptnet_forward.1} parent=50 // pred_check_branch
          %1040 = sbr.rel (%p1038) target = $region63
        $region62: #{metaoptnet_forward.1} parent=50 // pred_region
          %v1041 = vld [vmem:[#allocation2] sm:$0xff]
          %v1042 = vld [vmem:[#allocation2 + $0x8] sm:$0xff]
          %v1043 = vld [vmem:[#allocation2 + $0x10] sm:$0xff]
          %v1044 = vld [vmem:[#allocation2 + $0x18] sm:$0xff]
          %v1045 = vld [vmem:[#allocation2 + $0x20] sm:$0xff]
          %v1046 = vld [vmem:[#allocation2 + $0x28] sm:$0xff]
          %v1047 = vld [vmem:[#allocation2 + $0x30] sm:$0xff]
          %v1048 = vld [vmem:[#allocation2 + $0x38] sm:$0xff]
          %v1049 = vld [vmem:[#allocation2 + $0x40] sm:$0xff]
          %v1050 = vld [vmem:[#allocation2 + $0x48] sm:$0xff]
          %v1051 = vld [vmem:[#allocation2 + $0x50] sm:$0xff]
          %v1052 = vld [vmem:[#allocation2 + $0x58] sm:$0xff]
          %v1053 = vld [vmem:[#allocation2 + $0x60] sm:$0xff]
          %v1054 = vld [vmem:[#allocation2 + $0x68] sm:$0xff]
          %v1055 = vld [vmem:[#allocation2 + $0x70] sm:$0xff]
          %v1056 = vld [vmem:[#allocation2 + $0x78] sm:$0xff]
          %v1057 = vld [vmem:[#allocation2 + $0x80] sm:$0xff]
          %v1058 = vld [vmem:[%s2] sm:$0x1]
          %v1060 = vlaneseq
          %v1061 = vshrl.u32 %v1060, 7
          %v1062 = vsub.s32 0, %v1061
          %v1063 = vrot.slane %v1058, %v1062
          %v1065 = vadd.f32 %v1041, %v1063
          %v1066 = vadd.f32 %v1042, %v1063
          %v1067 = vadd.f32 %v1043, %v1063
          %v1068 = vadd.f32 %v1044, %v1063
          %v1069 = vadd.f32 %v1045, %v1063
          %v1070 = vadd.f32 %v1046, %v1063
          %v1071 = vadd.f32 %v1047, %v1063
          %v1072 = vadd.f32 %v1048, %v1063
          %v1073 = vadd.f32 %v1049, %v1063
          %v1074 = vadd.f32 %v1050, %v1063
          %v1075 = vadd.f32 %v1051, %v1063
          %v1076 = vadd.f32 %v1052, %v1063
          %v1077 = vadd.f32 %v1053, %v1063
          %v1078 = vadd.f32 %v1054, %v1063
          %v1079 = vadd.f32 %v1055, %v1063
          %v1080 = vadd.f32 %v1056, %v1063
          %v1081 = vadd.f32 %v1057, %v1063
          %v1082 = vmax.f32 %v1065, 0.0
          %v1083 = vmax.f32 %v1066, 0.0
          %v1084 = vmax.f32 %v1067, 0.0
          %v1085 = vmax.f32 %v1068, 0.0
          %v1086 = vmax.f32 %v1069, 0.0
          %v1087 = vmax.f32 %v1070, 0.0
          %v1088 = vmax.f32 %v1071, 0.0
          %v1089 = vmax.f32 %v1072, 0.0
          %v1090 = vmax.f32 %v1073, 0.0
          %v1091 = vmax.f32 %v1074, 0.0
          %v1092 = vmax.f32 %v1075, 0.0
          %v1093 = vmax.f32 %v1076, 0.0
          %v1094 = vmax.f32 %v1077, 0.0
          %v1095 = vmax.f32 %v1078, 0.0
          %v1096 = vmax.f32 %v1079, 0.0
          %v1097 = vmax.f32 %v1080, 0.0
          %v1098 = vmax.f32 %v1081, 0.0
          %v1099 = vpack.c.bf16 %v1083, %v1082
          %v1100 = vpack.c.bf16 %v1085, %v1084
          %v1101 = vpack.c.bf16 %v1087, %v1086
          %v1102 = vpack.c.bf16 %v1089, %v1088
          %v1103 = vpack.c.bf16 %v1091, %v1090
          %v1104 = vpack.c.bf16 %v1093, %v1092
          %v1105 = vpack.c.bf16 %v1095, %v1094
          %v1106 = vpack.c.bf16 %v1097, %v1096
          %v1107 = vpack.c.bf16 %v1098, %v1098
          %v1108 = vlaneseq
          %v1109 = vshrl.u32 %v1108, 7
          %v1110 = vadd.s32 %v1109, 8
          %v1111 = vadd.s32 %v1109, 16
          %v1112 = vadd.s32 %v1109, 24
          %v1113 = vadd.s32 %v1109, 32
          %v1114 = vadd.s32 %v1109, 40
          %v1115 = vadd.s32 %v1109, 48
          %v1116 = vadd.s32 %v1109, 56
          %v1117 = vadd.s32 %v1109, 64
          %v1118 = vadd.s32 %v1109, 72
          %v1119 = vadd.s32 %v1109, 80
          %v1120 = vadd.s32 %v1109, 88
          %v1121 = vadd.s32 %v1109, 96
          %v1122 = vadd.s32 %v1109, 104
          %v1123 = vadd.s32 %v1109, 112
          %v1124 = vadd.s32 %v1109, 120
          %v1125 = vadd.s32 %v1109, 128
          %vm1126 = vcmp.lt.s32.totalorder %v1109, 4
          %vm1127 = vcmp.lt.s32.totalorder %v1110, 4
          %vm1128 = vcmp.lt.s32.totalorder %v1111, 4
          %vm1129 = vcmp.lt.s32.totalorder %v1112, 4
          %vm1130 = vcmp.lt.s32.totalorder %v1113, 4
          %vm1131 = vcmp.lt.s32.totalorder %v1114, 4
          %vm1132 = vcmp.lt.s32.totalorder %v1115, 4
          %vm1133 = vcmp.lt.s32.totalorder %v1116, 4
          %vm1134 = vcmp.lt.s32.totalorder %v1117, 4
          %vm1135 = vcmp.lt.s32.totalorder %v1118, 4
          %vm1136 = vcmp.lt.s32.totalorder %v1119, 4
          %vm1137 = vcmp.lt.s32.totalorder %v1120, 4
          %vm1138 = vcmp.lt.s32.totalorder %v1121, 4
          %vm1139 = vcmp.lt.s32.totalorder %v1122, 4
          %vm1140 = vcmp.lt.s32.totalorder %v1123, 4
          %vm1141 = vcmp.lt.s32.totalorder %v1124, 4
          %vm1142 = vcmp.lt.s32.totalorder %v1125, 4
          %vm1143 = vcmp.ge.s32.totalorder %v1109, 128
          %vm1144 = vcmp.ge.s32.totalorder %v1110, 128
          %vm1145 = vcmp.ge.s32.totalorder %v1111, 128
          %vm1146 = vcmp.ge.s32.totalorder %v1112, 128
          %vm1147 = vcmp.ge.s32.totalorder %v1113, 128
          %vm1148 = vcmp.ge.s32.totalorder %v1114, 128
          %vm1149 = vcmp.ge.s32.totalorder %v1115, 128
          %vm1150 = vcmp.ge.s32.totalorder %v1116, 128
          %vm1151 = vcmp.ge.s32.totalorder %v1117, 128
          %vm1152 = vcmp.ge.s32.totalorder %v1118, 128
          %vm1153 = vcmp.ge.s32.totalorder %v1119, 128
          %vm1154 = vcmp.ge.s32.totalorder %v1120, 128
          %vm1155 = vcmp.ge.s32.totalorder %v1121, 128
          %vm1156 = vcmp.ge.s32.totalorder %v1122, 128
          %vm1157 = vcmp.ge.s32.totalorder %v1123, 128
          %vm1158 = vcmp.ge.s32.totalorder %v1124, 128
          %vm1159 = vcmp.ge.s32.totalorder %v1125, 128
          %vm1160 = vcmp.lt.s32.totalorder %v1109, 134
          %vm1161 = vcmp.lt.s32.totalorder %v1110, 134
          %vm1162 = vcmp.lt.s32.totalorder %v1111, 134
          %vm1163 = vcmp.lt.s32.totalorder %v1112, 134
          %vm1164 = vcmp.lt.s32.totalorder %v1113, 134
          %vm1165 = vcmp.lt.s32.totalorder %v1114, 134
          %vm1166 = vcmp.lt.s32.totalorder %v1115, 134
          %vm1167 = vcmp.lt.s32.totalorder %v1116, 134
          %vm1168 = vcmp.lt.s32.totalorder %v1117, 134
          %vm1169 = vcmp.lt.s32.totalorder %v1118, 134
          %vm1170 = vcmp.lt.s32.totalorder %v1119, 134
          %vm1171 = vcmp.lt.s32.totalorder %v1120, 134
          %vm1172 = vcmp.lt.s32.totalorder %v1121, 134
          %vm1173 = vcmp.lt.s32.totalorder %v1122, 134
          %vm1174 = vcmp.lt.s32.totalorder %v1123, 134
          %vm1175 = vcmp.lt.s32.totalorder %v1124, 134
          %vm1176 = vcmp.lt.s32.totalorder %v1125, 134
          %vm1177 = vmand %vm1143, %vm1160
          %vm1178 = vmand %vm1144, %vm1161
          %vm1179 = vmand %vm1145, %vm1162
          %vm1180 = vmand %vm1146, %vm1163
          %vm1181 = vmand %vm1147, %vm1164
          %vm1182 = vmand %vm1148, %vm1165
          %vm1183 = vmand %vm1149, %vm1166
          %vm1184 = vmand %vm1150, %vm1167
          %vm1185 = vmand %vm1151, %vm1168
          %vm1186 = vmand %vm1152, %vm1169
          %vm1187 = vmand %vm1153, %vm1170
          %vm1188 = vmand %vm1154, %vm1171
          %vm1189 = vmand %vm1155, %vm1172
          %vm1190 = vmand %vm1156, %vm1173
          %vm1191 = vmand %vm1157, %vm1174
          %vm1192 = vmand %vm1158, %vm1175
          %vm1193 = vmand %vm1159, %vm1176
          %vm1194 = vmor %vm1126, %vm1177
          %vm1195 = vmor %vm1127, %vm1178
          %vm1196 = vmor %vm1128, %vm1179
          %vm1197 = vmor %vm1129, %vm1180
          %vm1198 = vmor %vm1130, %vm1181
          %vm1199 = vmor %vm1131, %vm1182
          %vm1200 = vmor %vm1132, %vm1183
          %vm1201 = vmor %vm1133, %vm1184
          %vm1202 = vmor %vm1134, %vm1185
          %vm1203 = vmor %vm1135, %vm1186
          %vm1204 = vmor %vm1136, %vm1187
          %vm1205 = vmor %vm1137, %vm1188
          %vm1206 = vmor %vm1138, %vm1189
          %vm1207 = vmor %vm1139, %vm1190
          %vm1208 = vmor %vm1140, %vm1191
          %vm1209 = vmor %vm1141, %vm1192
          %vm1210 = vmor %vm1142, %vm1193
          %v1211 = vsel %vm1194, 1, 0
          %v1212 = vsel %vm1195, 1, 0
          %v1213 = vsel %vm1196, 1, 0
          %v1214 = vsel %vm1197, 1, 0
          %v1215 = vsel %vm1198, 1, 0
          %v1216 = vsel %vm1199, 1, 0
          %v1217 = vsel %vm1200, 1, 0
          %v1218 = vsel %vm1201, 1, 0
          %v1219 = vsel %vm1202, 1, 0
          %v1220 = vsel %vm1203, 1, 0
          %v1221 = vsel %vm1204, 1, 0
          %v1222 = vsel %vm1205, 1, 0
          %v1223 = vsel %vm1206, 1, 0
          %v1224 = vsel %vm1207, 1, 0
          %v1225 = vsel %vm1208, 1, 0
          %v1226 = vsel %vm1209, 1, 0
          %v1227 = vsel %vm1210, 1, 0
          %vm1228 = vcmp.eq.s32.totalorder %v1211, 1
          %vm1229 = vcmp.eq.s32.totalorder %v1212, 1
          %vm1230 = vcmp.eq.s32.totalorder %v1213, 1
          %vm1231 = vcmp.eq.s32.totalorder %v1214, 1
          %vm1232 = vcmp.eq.s32.totalorder %v1215, 1
          %vm1233 = vcmp.eq.s32.totalorder %v1216, 1
          %vm1234 = vcmp.eq.s32.totalorder %v1217, 1
          %vm1235 = vcmp.eq.s32.totalorder %v1218, 1
          %vm1236 = vcmp.eq.s32.totalorder %v1219, 1
          %vm1237 = vcmp.eq.s32.totalorder %v1220, 1
          %vm1238 = vcmp.eq.s32.totalorder %v1221, 1
          %vm1239 = vcmp.eq.s32.totalorder %v1222, 1
          %vm1240 = vcmp.eq.s32.totalorder %v1223, 1
          %vm1241 = vcmp.eq.s32.totalorder %v1224, 1
          %vm1242 = vcmp.eq.s32.totalorder %v1225, 1
          %vm1243 = vcmp.eq.s32.totalorder %v1226, 1
          %vm1244 = vcmp.eq.s32.totalorder %v1227, 1
          %vm1245 = vmpackc.low %vm1228, %vm1228
          %vm1246 = vmpackc.low %vm1229, %vm1229
          %vm1247 = vmpackc.low %vm1230, %vm1230
          %vm1248 = vmpackc.low %vm1231, %vm1231
          %vm1249 = vmpackc.low %vm1232, %vm1232
          %vm1250 = vmpackc.low %vm1233, %vm1233
          %vm1251 = vmpackc.low %vm1234, %vm1234
          %vm1252 = vmpackc.low %vm1235, %vm1235
          %vm1253 = vmpackc.low %vm1236, %vm1236
          %vm1254 = vmpackc.low %vm1237, %vm1237
          %vm1255 = vmpackc.low %vm1238, %vm1238
          %vm1256 = vmpackc.low %vm1239, %vm1239
          %vm1257 = vmpackc.low %vm1240, %vm1240
          %vm1258 = vmpackc.low %vm1241, %vm1241
          %vm1259 = vmpackc.low %vm1242, %vm1242
          %vm1260 = vmpackc.low %vm1243, %vm1243
          %vm1261 = vmpackc.low %vm1244, %vm1244
          %v1262 = vsel %vm1245, 65537, 0
          %v1263 = vsel %vm1246, 65537, 0
          %v1264 = vsel %vm1247, 65537, 0
          %v1265 = vsel %vm1248, 65537, 0
          %v1266 = vsel %vm1249, 65537, 0
          %v1267 = vsel %vm1250, 65537, 0
          %v1268 = vsel %vm1251, 65537, 0
          %v1269 = vsel %vm1252, 65537, 0
          %v1270 = vsel %vm1253, 65537, 0
          %v1271 = vsel %vm1254, 65537, 0
          %v1272 = vsel %vm1255, 65537, 0
          %v1273 = vsel %vm1256, 65537, 0
          %v1274 = vsel %vm1257, 65537, 0
          %v1275 = vsel %vm1258, 65537, 0
          %v1276 = vsel %vm1259, 65537, 0
          %v1277 = vsel %vm1260, 65537, 0
          %v1278 = vsel %vm1261, 65537, 0
          %v1279 = vunpack.c.l.b16 %v1262
          %v1280 = vunpack.c.l.b16 %v1263
          %v1281 = vunpack.c.l.b16 %v1264
          %v1282 = vunpack.c.l.b16 %v1265
          %v1283 = vunpack.c.l.b16 %v1266
          %v1284 = vunpack.c.l.b16 %v1267
          %v1285 = vunpack.c.l.b16 %v1268
          %v1286 = vunpack.c.l.b16 %v1269
          %v1287 = vunpack.c.l.b16 %v1270
          %v1288 = vunpack.c.l.b16 %v1271
          %v1289 = vunpack.c.l.b16 %v1272
          %v1290 = vunpack.c.l.b16 %v1273
          %v1291 = vunpack.c.l.b16 %v1274
          %v1292 = vunpack.c.l.b16 %v1275
          %v1293 = vunpack.c.l.b16 %v1276
          %v1294 = vunpack.c.l.b16 %v1277
          %v1295 = vunpack.c.l.b16 %v1278
          %v1296 = vpack.c.b16 %v1280, %v1279
          %v1297 = vpack.c.b16 %v1282, %v1281
          %v1298 = vpack.c.b16 %v1284, %v1283
          %v1299 = vpack.c.b16 %v1286, %v1285
          %v1300 = vpack.c.b16 %v1288, %v1287
          %v1301 = vpack.c.b16 %v1290, %v1289
          %v1302 = vpack.c.b16 %v1292, %v1291
          %v1303 = vpack.c.b16 %v1294, %v1293
          %v1304 = vpack.c.b16 %v1295, %v1295
          %vm1305 = vcmp.ne.s16.totalorder %v1296, 0
          %vm1306 = vcmp.ne.s16.totalorder %v1297, 0
          %vm1307 = vcmp.ne.s16.totalorder %v1298, 0
          %vm1308 = vcmp.ne.s16.totalorder %v1299, 0
          %vm1309 = vcmp.ne.s16.totalorder %v1300, 0
          %vm1310 = vcmp.ne.s16.totalorder %v1301, 0
          %vm1311 = vcmp.ne.s16.totalorder %v1302, 0
          %vm1312 = vcmp.ne.s16.totalorder %v1303, 0
          %vm1313 = vcmp.ne.s16.totalorder %v1304, 0
          %v1314 = vsel %vm1305, %v1099, 0
          %v1315 = vsel %vm1306, %v1100, 0
          %v1316 = vsel %vm1307, %v1101, 0
          %v1317 = vsel %vm1308, %v1102, 0
          %v1318 = vsel %vm1309, %v1103, 0
          %v1319 = vsel %vm1310, %v1104, 0
          %v1320 = vsel %vm1311, %v1105, 0
          %v1321 = vsel %vm1312, %v1106, 0
          %v1322 = vsel %vm1313, %v1107, 0
          %1323 = vmatprep.subr.bf16.mxu0 0
          %1324 = vmatpush1.bf16.xpose.msra.mxu0 %v1314
          %1325 = vmatprep.subr.bf16.mxu0 0
          %1326 = vmatpush1.bf16.xpose.msra.mxu0 %v1315
          %1327 = vmatprep.subr.bf16.mxu0 0
          %1328 = vmatpush1.bf16.xpose.msra.mxu0 %v1316
          %1329 = vmatprep.subr.bf16.mxu0 0
          %1330 = vmatpush1.bf16.xpose.msra.mxu0 %v1317
          %1331 = vmatprep.subr.bf16.mxu0 0
          %1332 = vmatpush1.bf16.xpose.msra.mxu0 %v1318
          %1333 = vmatprep.subr.bf16.mxu0 0
          %1334 = vmatpush1.bf16.xpose.msra.mxu0 %v1319
          %1335 = vmatprep.subr.bf16.mxu0 0
          %1336 = vmatpush1.bf16.xpose.msra.mxu0 %v1320
          %1337 = vmatprep.subr.bf16.mxu0 0
          %1338 = vmatpush1.bf16.xpose.msra.mxu0 %v1321
          %1339 = vmatprep.subr.bf16.mxu0 0
          %1340 = vmatpush1.bf16.xpose.msra.mxu0 0
          %1341 = vmatprep.subr.bf16.mxu0 0
          %1342 = vmatpush1.bf16.xpose.msra.mxu0 0
          %1343 = vmatprep.subr.bf16.mxu0 0
          %1344 = vmatpush1.bf16.xpose.msra.mxu0 0
          %1345 = vmatprep.subr.bf16.mxu0 0
          %1346 = vmatpush1.bf16.xpose.msra.mxu0 0
          %1347 = vmatprep.subr.bf16.mxu0 0
          %1348 = vmatpush1.bf16.xpose.msra.mxu0 0
          %1349 = vmatprep.subr.bf16.mxu0 0
          %1350 = vmatpush1.bf16.xpose.msra.mxu0 0
          %1351 = vmatprep.subr.bf16.mxu0 0
          %1352 = vmatpush1.bf16.xpose.msra.mxu0 0
          %1353 = vmatprep.subr.bf16.mxu0 0
          %1354 = vmatpush1.bf16.xpose.msra.mxu0 0
          %1355 = vmatprep.mubr.bf16.mxu0 0
          %1356 = vmatmul.mubr.bf16.gmra.mrb[0].mxu0 %v1314
          %v1357 = vpop.f32.mrb[0].mxu0
          %v1358 = vadd.f32 0.0, %v1357
          %v1359 = vpop.f32.mrb[0].mxu0
          %v1360 = vpop.f32.mrb[0].mxu0
          %v1361 = vadd.f32 0.0, %v1360
          %v1362 = vpop.f32.mrb[0].mxu0
          %1363 = vmatprep.mubr.bf16.mxu0 0
          %1364 = vmatmul.mubr.bf16.gmra.mrb[0].mxu0 %v1315
          %v1365 = vpop.f32.mrb[0].mxu0
          %v1366 = vadd.f32 0.0, %v1365
          %v1367 = vpop.f32.mrb[0].mxu0
          %v1368 = vpop.f32.mrb[0].mxu0
          %v1369 = vadd.f32 0.0, %v1368
          %v1370 = vpop.f32.mrb[0].mxu0
          %1371 = vmatprep.mubr.bf16.mxu0 0
          %1372 = vmatmul.mubr.bf16.gmra.mrb[0].mxu0 %v1316
          %v1373 = vpop.f32.mrb[0].mxu0
          %v1374 = vadd.f32 0.0, %v1373
          %v1375 = vpop.f32.mrb[0].mxu0
          %v1376 = vpop.f32.mrb[0].mxu0
          %v1377 = vadd.f32 0.0, %v1376
          %v1378 = vpop.f32.mrb[0].mxu0
          %1379 = vmatprep.mubr.bf16.mxu0 0
          %1380 = vmatmul.mubr.bf16.gmra.mrb[0].mxu0 %v1317
          %v1381 = vpop.f32.mrb[0].mxu0
          %v1382 = vadd.f32 0.0, %v1381
          %v1383 = vpop.f32.mrb[0].mxu0
          %v1384 = vpop.f32.mrb[0].mxu0
          %v1385 = vadd.f32 0.0, %v1384
          %v1386 = vpop.f32.mrb[0].mxu0
          %1387 = vmatprep.mubr.bf16.mxu0 0
          %1388 = vmatmul.mubr.bf16.gmra.mrb[0].mxu0 %v1318
          %v1389 = vpop.f32.mrb[0].mxu0
          %v1390 = vadd.f32 0.0, %v1389
          %v1391 = vpop.f32.mrb[0].mxu0
          %v1392 = vpop.f32.mrb[0].mxu0
          %v1393 = vadd.f32 0.0, %v1392
          %v1394 = vpop.f32.mrb[0].mxu0
          %1395 = vmatprep.mubr.bf16.mxu0 0
          %1396 = vmatmul.mubr.bf16.gmra.mrb[0].mxu0 %v1319
          %v1397 = vpop.f32.mrb[0].mxu0
          %v1398 = vadd.f32 0.0, %v1397
          %v1399 = vpop.f32.mrb[0].mxu0
          %v1400 = vpop.f32.mrb[0].mxu0
          %v1401 = vadd.f32 0.0, %v1400
          %v1402 = vpop.f32.mrb[0].mxu0
          %1403 = vmatprep.mubr.bf16.mxu0 0
          %1404 = vmatmul.mubr.bf16.gmra.mrb[0].mxu0 %v1320
          %v1405 = vpop.f32.mrb[0].mxu0
          %v1406 = vadd.f32 0.0, %v1405
          %v1407 = vpop.f32.mrb[0].mxu0
          %v1408 = vpop.f32.mrb[0].mxu0
          %v1409 = vadd.f32 0.0, %v1408
          %v1410 = vpop.f32.mrb[0].mxu0
          %1411 = vmatprep.mubr.bf16.mxu0 0
          %1412 = vmatmul.mubr.bf16.gmra.mrb[0].mxu0 %v1321
          %v1413 = vpop.f32.mrb[0].mxu0
          %v1414 = vadd.f32 0.0, %v1413
          %v1415 = vpop.f32.mrb[0].mxu0
          %v1416 = vpop.f32.mrb[0].mxu0
          %v1417 = vadd.f32 0.0, %v1416
          %v1418 = vpop.f32.mrb[0].mxu0
          %1419 = vmatprep.mubr.bf16.mxu0 0
          %1420 = vmatmul.mubr.bf16.gmra.mrb[0].mxu0 %v1322
          %v1421 = vpop.f32.mrb[0].mxu0
          %v1422 = vadd.f32 0.0, %v1421
          %v1423 = vpop.f32.mrb[0].mxu0
          %v1424 = vpop.f32.mrb[0].mxu0
          %v1425 = vpop.f32.mrb[0].mxu0
          %1426 = vdwg.mxu0
          %1427 = vst [vmem:[%s3] sm:$0xff] %v1358
          %1428 = vst [vmem:[%s3 + $0x8] sm:$0xff] %v1361
          %1429 = vst [vmem:[%s3 + $0x10] sm:$0xff] %v1366
          %1430 = vst [vmem:[%s3 + $0x18] sm:$0xff] %v1369
          %1431 = vst [vmem:[%s3 + $0x20] sm:$0xff] %v1374
          %1432 = vst [vmem:[%s3 + $0x28] sm:$0xff] %v1377
          %1433 = vst [vmem:[%s3 + $0x30] sm:$0xff] %v1382
          %1434 = vst [vmem:[%s3 + $0x38] sm:$0xff] %v1385
          %1435 = vst [vmem:[%s3 + $0x40] sm:$0xff] %v1390
          %1436 = vst [vmem:[%s3 + $0x48] sm:$0xff] %v1393
          %1437 = vst [vmem:[%s3 + $0x50] sm:$0xff] %v1398
          %1438 = vst [vmem:[%s3 + $0x58] sm:$0xff] %v1401
          %1439 = vst [vmem:[%s3 + $0x60] sm:$0xff] %v1406
          %1440 = vst [vmem:[%s3 + $0x68] sm:$0xff] %v1409
          %1441 = vst [vmem:[%s3 + $0x70] sm:$0xff] %v1414
          %1442 = vst [vmem:[%s3 + $0x78] sm:$0xff] %v1417
          %1443 = vst [vmem:[%s4] sm:$0xff] %v1422
        $region63: #{metaoptnet_forward.1} parent=50 // pred_fallthru
          _
        // Predicated region
        $region64: #{metaoptnet_forward.1} parent=50 // pred_check
          %p1444 = pneg %p102
        $region65: #{metaoptnet_forward.1} parent=50 // pred_check_branch
          %1446 = sbr.rel (%p1444) target = $region67
        $region66: #{metaoptnet_forward.1} parent=50 // pred_region
          _
        $region67: #{metaoptnet_forward.1} parent=50 // pred_fallthru
          _
        // Predicated region
        $region68: #{metaoptnet_forward.1} parent=50 // pred_check
          %p1447 = pneg %p123
        $region69: #{metaoptnet_forward.1} parent=50 // pred_check_branch
          %1449 = sbr.rel (%p1447) target = $region71
        $region70: #{metaoptnet_forward.1} parent=50 // pred_region
          _
        $region71: #{metaoptnet_forward.1} parent=50 // pred_fallthru
          _
        // Predicated region
        $region72: #{metaoptnet_forward.1} parent=50 // pred_check
          %p1450 = pneg %p102
        $region73: #{metaoptnet_forward.1} parent=50 // pred_check_branch
          %1452 = sbr.rel (%p1450) target = $region75
        $region74: #{metaoptnet_forward.1} parent=50 // pred_region
          _
        $region75: #{metaoptnet_forward.1} parent=50 // pred_fallthru
          _
        // Predicated region
        $region76: #{metaoptnet_forward.1} parent=50 // pred_check
          %p1453 = pneg %p123
        $region77: #{metaoptnet_forward.1} parent=50 // pred_check_branch
          %1455 = sbr.rel (%p1453) target = $region79
        $region78: #{metaoptnet_forward.1} parent=50 // pred_region
          _
        $region79: #{metaoptnet_forward.1} parent=50 // pred_fallthru
          _
      $region51: #{metaoptnet_forward.1} parent=5 // pred_fallthru
        _
      %p1456 = scmp.le.s32.totalorder 2, %s11
      // Predicated region
      $region80: #{metaoptnet_forward.1} parent=5 // pred_check
        %p1457 = pneg %p1456
      $region81: #{metaoptnet_forward.1} parent=5 // pred_check_branch
        %1459 = sbr.rel (%p1457) target = $region83
      $region82: #{metaoptnet_forward.1} parent=5 // pred_region
        %s1460 = ssub.s32 %s11, 2
      $region83: #{metaoptnet_forward.1} parent=5 // pred_fallthru
        _
    $region6: #{metaoptnet_forward.1} parent=1 // loop_footer
      %s15 = sadd.s32 1, %s11
    $region7: #{metaoptnet_forward.1} parent=1 // loop_footer_branch
      %10 = sbr.rel target = $region3
    $region8: #{metaoptnet_forward.1} parent=1 // loop_exit
      _

</llo_original>
